<compile_context>
chip_gen: v7x
topology: tpu7x:2x2x1
jax: 0.10.0
libtpu: 0.0.40
codegen_flags: <defaults>
</compile_context>

<pallas_src>
import functools

import jax
import jax.numpy as jnp
from jax import lax
from jax.experimental import pallas as pl
from jax.experimental.pallas import tpu as pltpu


CPAD = 128        # lane width for the (padded) conv1-output channel dim
_BN_EPS = 1e-5


def _round_up(x, m):
    return (x + m - 1) // m * m


# ----------------------------- Pallas kernel --------------------------------

def _down_doubleconv_kernel(xf_ref, w1_ref, s1_ref, w2_ref, s2_ref,
                            o_ref, mid_ref, *, Hp, Wp):
    """Fused (conv3x3 => BN => ReLU) * 2 for one pooled image.

    Layout: "flattened padded rows".  A spatially padded image (Hq, Wq, C) is
    stored flat as (Hq*Wq, C); the 3x3 tap (dy, dx) for every output position
    is then the contiguous slice [dy*Wq+dx : dy*Wq+dx + Hp*Wq] -- one shifted
    load, no window/reshape relayout.  Outputs are produced on an (Hp, Wq)
    grid; the 2 junk columns per row are masked to zero for conv1 (they land
    on the halo of the mid buffer) and sliced off outside for conv2.

    xf_ref : (1, Lx, Cin)        pooled input, zero-padded, row-flattened, bf16
    w1_ref : (9*Cin, CPAD)       conv1 taps stacked on K, BN scale folded, bf16
    s1_ref : (1, CPAD)           conv1 BN shift, f32
    w2_ref : (9*CPAD, CoutP)     conv2 taps stacked on K, BN scale folded, bf16
    s2_ref : (1, CoutP)          conv2 BN shift, f32
    o_ref  : (1, Hp*Wq, CoutP)   output (junk columns sliced off outside), f32
    mid_ref: VMEM (Lm, CPAD)     row-flattened zero-padded conv1 activation, bf16
    """
    Wq = Wp + 2
    Lout = Hp * Wq
    base = (-(Wq + 1)) % 8          # front pad so the big mid store is aligned
    off = base + Wq + 1             # where conv1's output starts in mid_ref
    Lm = mid_ref.shape[0]
    CP = mid_ref.shape[1]

    # ---- conv1 + BN + ReLU: one GEMM, K = 9*Cin ------------------------------
    taps1 = [xf_ref[0, dy * Wq + dx: dy * Wq + dx + Lout, :]
             for dy in range(3) for dx in range(3)]
    patch1 = jnp.concatenate(taps1, axis=-1)              # (Lout, 9*Cin) bf16
    a1 = jnp.dot(patch1, w1_ref[...], preferred_element_type=jnp.float32)
    a1 = jnp.maximum(a1 + s1_ref[...], 0.0)               # (Lout, CPAD) f32

    # Junk columns (x >= Wp) land exactly on the halo of the padded mid buffer:
    # zero them here so the halo stays zero without re-clearing the scratch.
    col = lax.broadcasted_iota(jnp.int32, (Lout, 1), 0) % Wq
    a1 = jnp.where(col < Wp, a1, 0.0)

    # Only the few halo rows NOT overwritten each step need clearing (~2 rows),
    # then one aligned store of the whole activation.  (No full scratch zero.)
    mid_ref[0:off, :] = jnp.zeros((off, CP), jnp.bfloat16)
    mid_ref[off + Lout:Lm, :] = jnp.zeros((Lm - off - Lout, CP), jnp.bfloat16)
    mid_ref[off:off + Lout, :] = a1.astype(jnp.bfloat16)

    # ---- conv2 + BN + ReLU: one GEMM, K = 9*CPAD (MXU-side accumulation) -----
    taps2 = [mid_ref[base + dy * Wq + dx: base + dy * Wq + dx + Lout, :]
             for dy in range(3) for dx in range(3)]
    patch2 = jnp.concatenate(taps2, axis=-1)               # (Lout, 9*CPAD) bf16
    a2 = jnp.dot(patch2, w2_ref[...], preferred_element_type=jnp.float32)
    o_ref[0] = jnp.maximum(a2 + s2_ref[...], 0.0).astype(o_ref.dtype)


# ------------------------------- wrapper -------------------------------------

def _fold_bn_weights(w_oihw, gamma, beta, mean, var, eps, cin_pad, cout_pad):
    """Fold inference BN into the conv weight; lay out as (9*cin_pad, cout_pad)."""
    O, I, KH, KW = w_oihw.shape
    s = gamma / jnp.sqrt(var + eps)
    w = w_oihw * s[:, None, None, None]                    # scale into conv
    shift = beta - mean * s
    wm = jnp.transpose(w, (2, 3, 1, 0))                    # (KH, KW, I, O) tap-major
    wm = jnp.pad(wm, ((0, 0), (0, 0), (0, cin_pad - I), (0, cout_pad - O)))
    wm = wm.reshape(KH * KW * cin_pad, cout_pad)
    shift = jnp.pad(shift, (0, cout_pad - O)).reshape(1, cout_pad)
    return wm.astype(jnp.bfloat16), shift.astype(jnp.float32)


@jax.jit
def down_forward(x_nchw, p):
    N, Cin, H, W = x_nchw.shape
    Hp, Wp = H // 2, W // 2
    Hq, Wq = Hp + 2, Wp + 2
    Lout = Hp * Wq
    Cmid = p["w1"].shape[0]
    Cout = p["w2"].shape[0]
    assert Cmid <= CPAD
    cout_pad = _round_up(Cout, 8)

    base = (-(Wq + 1)) % 8
    Lx = _round_up(Hq * Wq + 2, 8)             # +2: tap overrun of the row trick
    Lm = _round_up(base + Hq * Wq + 2, 8)

    # NCHW -> NHWC, 2x2 maxpool, zero-pad, flatten rows, cast bf16.  All of this
    # fuses into one XLA pass over x; pooling BEFORE the HBM round trip moves 4x
    # less data than pooling inside the kernel would (the NCHW->NHWC relayout
    # has to happen in XLA either way).
    x = jnp.transpose(x_nchw, (0, 2, 3, 1))
    x = x.reshape(N, Hp, 2, Wp, 2, Cin).max(axis=(2, 4))
    xp = jnp.pad(x, ((0, 0), (1, 1), (1, 1), (0, 0)))
    xf = xp.reshape(N, Hq * Wq, Cin)
    xf = jnp.pad(xf, ((0, 0), (0, Lx - Hq * Wq), (0, 0))).astype(jnp.bfloat16)

    # Fold inference BN into the weights (bf16 operands, f32 shift).
    w1p, s1p = _fold_bn_weights(p["w1"], p["g1"], p["b1"], p["m1"], p["v1"],
                                _BN_EPS, cin_pad=Cin, cout_pad=CPAD)
    w2p, s2p = _fold_bn_weights(p["w2"], p["g2"], p["b2"], p["m2"], p["v2"],
                                _BN_EPS, cin_pad=CPAD, cout_pad=cout_pad)

    kernel = functools.partial(_down_doubleconv_kernel, Hp=Hp, Wp=Wp)
    out = pl.pallas_call(
        kernel,
        out_shape=jax.ShapeDtypeStruct((N, Lout, cout_pad), jnp.float32),
        grid=(N,),
        in_specs=[
            pl.BlockSpec((1, Lx, Cin), lambda b: (b, 0, 0)),
            pl.BlockSpec((9 * Cin, CPAD), lambda b: (0, 0)),
            pl.BlockSpec((1, CPAD), lambda b: (0, 0)),
            pl.BlockSpec((9 * CPAD, cout_pad), lambda b: (0, 0)),
            pl.BlockSpec((1, cout_pad), lambda b: (0, 0)),
        ],
        out_specs=pl.BlockSpec((1, Lout, cout_pad), lambda b: (b, 0, 0)),
        scratch_shapes=[pltpu.VMEM((Lm, CPAD), jnp.bfloat16)],
        compiler_params=pltpu.CompilerParams(
            dimension_semantics=("parallel",),
            vmem_limit_bytes=32 * 1024 * 1024),
    )(xf, w1p, s1p, w2p, s2p)

    # Drop the 2 junk columns per row and the channel padding, back to NCHW.
    out = out.reshape(N, Hp, Wq, cout_pad)[:, :, :Wp, :Cout]
    return jnp.transpose(out, (0, 3, 1, 2))


# ------------------------------ parameters -----------------------------------

def init_down_params(key, in_channels, out_channels, kernel_size=3):
    # Reproduces Down.__init__: DoubleConv(in_channels, out_channels, kernel_size)
    # => mid_channels = kernel_size (the original code's argument-order quirk).
    mid_channels = kernel_size
    ks = 3  # DoubleConv's own kernel_size default
    k = jax.random.split(key, 8)
    return {
        "w1": 0.1 * jax.random.normal(k[0], (mid_channels, in_channels, ks, ks), jnp.float32),
        "g1": 1.0 + 0.1 * jax.random.normal(k[1], (mid_channels,), jnp.float32),
        "b1": 0.1 * jax.random.normal(k[2], (mid_channels,), jnp.float32),
        "m1": 0.1 * jax.random.normal(k[3], (mid_channels,), jnp.float32),
        "v1": jnp.abs(jax.random.normal(k[4], (mid_channels,), jnp.float32)) + 0.5,
        "w2": 0.1 * jax.random.normal(k[5], (out_channels, mid_channels, ks, ks), jnp.float32),
        "g2": 1.0 + 0.1 * jax.random.normal(k[6], (out_channels,), jnp.float32),
        "b2": 0.1 * jax.random.normal(k[7], (out_channels,), jnp.float32),
        "m2": jnp.zeros((out_channels,), jnp.float32),
        "v2": jnp.ones((out_channels,), jnp.float32),
    }


# --------------------------- pure-JAX reference ------------------------------

def down_reference(x_nchw, p, eps=_BN_EPS):
    N, C, H, W = x_nchw.shape
    x = x_nchw.reshape(N, C, H // 2, 2, W // 2, 2).max(axis=(3, 5))

    def conv_bn_relu(x, w, g, b, m, v):
        y = jax.lax.conv_general_dilated(
            x, w, (1, 1), ((1, 1), (1, 1)),
            dimension_numbers=("NCHW", "OIHW", "NCHW"))
        s = g / jnp.sqrt(v + eps)
        y = y * s[None, :, None, None] + (b - m * s)[None, :, None, None]
        return jnp.maximum(y, 0.0)

    x = conv_bn_relu(x, p["w1"], p["g1"], p["b1"], p["m1"], p["v1"])
    x = conv_bn_relu(x, p["w2"], p["g2"], p["b2"], p["m2"], p["v2"])
    return x


# ---------------------------------- main --------------------------------------

if __name__ == "__main__":
    key = jax.random.PRNGKey(0)
    kx, kp = jax.random.split(key)

    in_channels, out_channels = 4, 8
    x = jax.random.normal(kx, (2, in_channels, 16, 16), jnp.float32)
    params = init_down_params(kp, in_channels, out_channels)

    out = jax.block_until_ready(down_forward(x, params))
    ref = down_reference(x, params)

    assert out.shape == (2, out_channels, 8, 8), out.shape
    # Matmul operands are bf16 (f32 MXU accumulation), so the tolerance vs. the
    # pure-f32 reference is loosened accordingly.
    assert jnp.allclose(out, ref, atol=5e-2, rtol=5e-2), \
        float(jnp.max(jnp.abs(out - ref)))

    print("KERNEL_OK")
</pallas_src>

<mosaic_0001>
module attributes {stable_mosaic.version = 11 : i64} {
  func.func @_down_doubleconv_kernel(%arg0: i32, %arg1: memref<1x104x4xbf16, #tpu.memory_space<vmem>>, %arg2: memref<36x128xbf16, #tpu.memory_space<vmem>>, %arg3: memref<1x128xf32, #tpu.memory_space<vmem>>, %arg4: memref<1152x8xbf16, #tpu.memory_space<vmem>>, %arg5: memref<1x8xf32, #tpu.memory_space<vmem>>, %arg6: memref<1x80x8xf32, #tpu.memory_space<vmem>>, %arg7: memref<112x128xbf16, #tpu.memory_space<vmem>>) attributes {dimension_semantics = [#tpu.dimension_semantics<parallel>], iteration_bounds = array<i64: 2>, scalar_prefetch = 0 : i64, scratch_operands = 1 : i64, tpu.core_type = #tpu.core_type<tc>, window_params = [{transform_indices = @transform_0, window_bounds = array<i64: 1, 104, 4>}, {pipeline_mode = #tpu.pipeline_mode<synchronous>, transform_indices = @transform_1, window_bounds = array<i64: 36, 128>}, {pipeline_mode = #tpu.pipeline_mode<synchronous>, transform_indices = @transform_2, window_bounds = array<i64: 1, 128>}, {pipeline_mode = #tpu.pipeline_mode<synchronous>, transform_indices = @transform_3, window_bounds = array<i64: 1152, 8>}, {pipeline_mode = #tpu.pipeline_mode<synchronous>, transform_indices = @transform_4, window_bounds = array<i64: 1, 8>}, {transform_indices = @transform_5, window_bounds = array<i64: 1, 80, 8>}]} {
    %c0 = arith.constant 0 : index
    %c0_0 = arith.constant 0 : index
    %c0_1 = arith.constant 0 : index
    %0 = vector.load %arg1[%c0, %c0_0, %c0_1] : memref<1x104x4xbf16, #tpu.memory_space<vmem>>, vector<1x80x4xbf16>
    %1 = vector.shape_cast %0 : vector<1x80x4xbf16> to vector<80x4xbf16>
    %c0_2 = arith.constant 0 : index
    %c1 = arith.constant 1 : index
    %c0_3 = arith.constant 0 : index
    %2 = vector.load %arg1[%c0_2, %c1, %c0_3] : memref<1x104x4xbf16, #tpu.memory_space<vmem>>, vector<1x80x4xbf16>
    %3 = vector.shape_cast %2 : vector<1x80x4xbf16> to vector<80x4xbf16>
    %c0_4 = arith.constant 0 : index
    %c2 = arith.constant 2 : index
    %c0_5 = arith.constant 0 : index
    %4 = vector.load %arg1[%c0_4, %c2, %c0_5] : memref<1x104x4xbf16, #tpu.memory_space<vmem>>, vector<1x80x4xbf16>
    %5 = vector.shape_cast %4 : vector<1x80x4xbf16> to vector<80x4xbf16>
    %c0_6 = arith.constant 0 : index
    %c10 = arith.constant 10 : index
    %c0_7 = arith.constant 0 : index
    %6 = vector.load %arg1[%c0_6, %c10, %c0_7] : memref<1x104x4xbf16, #tpu.memory_space<vmem>>, vector<1x80x4xbf16>
    %7 = vector.shape_cast %6 : vector<1x80x4xbf16> to vector<80x4xbf16>
    %c0_8 = arith.constant 0 : index
    %c11 = arith.constant 11 : index
    %c0_9 = arith.constant 0 : index
    %8 = vector.load %arg1[%c0_8, %c11, %c0_9] : memref<1x104x4xbf16, #tpu.memory_space<vmem>>, vector<1x80x4xbf16>
    %9 = vector.shape_cast %8 : vector<1x80x4xbf16> to vector<80x4xbf16>
    %c0_10 = arith.constant 0 : index
    %c12 = arith.constant 12 : index
    %c0_11 = arith.constant 0 : index
    %10 = vector.load %arg1[%c0_10, %c12, %c0_11] : memref<1x104x4xbf16, #tpu.memory_space<vmem>>, vector<1x80x4xbf16>
    %11 = vector.shape_cast %10 : vector<1x80x4xbf16> to vector<80x4xbf16>
    %c0_12 = arith.constant 0 : index
    %c20 = arith.constant 20 : index
    %c0_13 = arith.constant 0 : index
    %12 = vector.load %arg1[%c0_12, %c20, %c0_13] : memref<1x104x4xbf16, #tpu.memory_space<vmem>>, vector<1x80x4xbf16>
    %13 = vector.shape_cast %12 : vector<1x80x4xbf16> to vector<80x4xbf16>
    %c0_14 = arith.constant 0 : index
    %c21 = arith.constant 21 : index
    %c0_15 = arith.constant 0 : index
    %14 = vector.load %arg1[%c0_14, %c21, %c0_15] : memref<1x104x4xbf16, #tpu.memory_space<vmem>>, vector<1x80x4xbf16>
    %15 = vector.shape_cast %14 : vector<1x80x4xbf16> to vector<80x4xbf16>
    %c0_16 = arith.constant 0 : index
    %c22 = arith.constant 22 : index
    %c0_17 = arith.constant 0 : index
    %16 = vector.load %arg1[%c0_16, %c22, %c0_17] : memref<1x104x4xbf16, #tpu.memory_space<vmem>>, vector<1x80x4xbf16>
    %17 = vector.shape_cast %16 : vector<1x80x4xbf16> to vector<80x4xbf16>
    %18 = tpu.concatenate %1, %3, %5, %7, %9, %11, %13, %15, %17 in 1 : vector<80x4xbf16>, vector<80x4xbf16>, vector<80x4xbf16>, vector<80x4xbf16>, vector<80x4xbf16>, vector<80x4xbf16>, vector<80x4xbf16>, vector<80x4xbf16>, vector<80x4xbf16> -> vector<80x36xbf16>
    %c0_18 = arith.constant 0 : index
    %c0_19 = arith.constant 0 : index
    %19 = vector.load %arg2[%c0_18, %c0_19] : memref<36x128xbf16, #tpu.memory_space<vmem>>, vector<36x128xbf16>
    %cst = arith.constant dense<0.000000e+00> : vector<80x128xf32>
    %20 = tpu.matmul %18, %19, %cst {dimension_numbers = #tpu.dot_dimension_numbers<[1], [0], [0], [1], [0, 0, 1, 1], [], []>} : vector<80x36xbf16>, vector<36x128xbf16>, vector<80x128xf32> -> vector<80x128xf32>
    %c0_20 = arith.constant 0 : index
    %c0_21 = arith.constant 0 : index
    %21 = vector.load %arg3[%c0_20, %c0_21] : memref<1x128xf32, #tpu.memory_space<vmem>>, vector<1x128xf32>
    %22 = vector.broadcast %21 : vector<1x128xf32> to vector<80x128xf32>
    %23 = arith.addf %20, %22 : vector<80x128xf32>
    %cst_22 = arith.constant 0.000000e+00 : f32
    %24 = vector.broadcast %cst_22 : f32 to vector<80x128xf32>
    %25 = arith.maximumf %23, %24 : vector<80x128xf32>
    %26 = tpu.iota {dimensions = array<i32: 0>} : vector<80x1xi32>
    %c10_i32 = arith.constant 10 : i32
    %c0_i32 = arith.constant 0 : i32
    %27 = arith.cmpi eq, %c10_i32, %c0_i32 : i32
    %c1_i32 = arith.constant 1 : i32
    %28 = arith.select %27, %c1_i32, %c10_i32 : i32
    %29 = vector.broadcast %28 : i32 to vector<80x1xi32>
    %30 = arith.remsi %26, %29 : vector<80x1xi32>
    %c0_i32_23 = arith.constant 0 : i32
    %31 = vector.broadcast %c0_i32_23 : i32 to vector<80x1xi32>
    %32 = arith.cmpi ne, %30, %31 : vector<80x1xi32>
    %c0_i32_24 = arith.constant 0 : i32
    %33 = vector.broadcast %c0_i32_24 : i32 to vector<80x1xi32>
    %34 = arith.cmpi slt, %30, %33 : vector<80x1xi32>
    %c0_i32_25 = arith.constant 0 : i32
    %35 = arith.cmpi slt, %28, %c0_i32_25 : i32
    %36 = vector.broadcast %35 : i1 to vector<80x1xi1>
    %37 = vector.broadcast %36 : vector<80x1xi1> to vector<80x1xi1>
    %38 = arith.xori %34, %37 : vector<80x1xi1>
    %39 = arith.andi %38, %32 : vector<80x1xi1>
    %40 = vector.broadcast %28 : i32 to vector<80x1xi32>
    %41 = arith.addi %30, %40 : vector<80x1xi32>
    %42 = arith.select %39, %41, %30 : vector<80x1xi1>, vector<80x1xi32>
    %c8_i32 = arith.constant 8 : i32
    %43 = vector.broadcast %c8_i32 : i32 to vector<80x1xi32>
    %44 = arith.cmpi slt, %42, %43 : vector<80x1xi32>
    %cst_26 = arith.constant 0.000000e+00 : f32
    %45 = vector.shape_cast %44 : vector<80x1xi1> to vector<80x1xi1>
    %46 = vector.broadcast %45 : vector<80x1xi1> to vector<80x128xi1>
    %47 = vector.broadcast %cst_26 : f32 to vector<80x128xf32>
    %48 = arith.select %46, %25, %47 : vector<80x128xi1>, vector<80x128xf32>
    %cst_27 = arith.constant 0.000000e+00 : bf16
    %49 = vector.broadcast %cst_27 : bf16 to vector<16x128xbf16>
    %c0_28 = arith.constant 0 : index
    %c0_29 = arith.constant 0 : index
    %50 = vector.load %arg7[%c0_28, %c0_29] : memref<112x128xbf16, #tpu.memory_space<vmem>>, vector<16x128xbf16>
    tpu.vector_store %arg7[%c0_28, %c0_29], %49 {strides = array<i32>} : memref<112x128xbf16, #tpu.memory_space<vmem>>, vector<16x128xbf16>,
    %cst_30 = arith.constant 0.000000e+00 : bf16
    %51 = vector.broadcast %cst_30 : bf16 to vector<16x128xbf16>
    %c96 = arith.constant 96 : index
    %c0_31 = arith.constant 0 : index
    %52 = vector.load %arg7[%c96, %c0_31] : memref<112x128xbf16, #tpu.memory_space<vmem>>, vector<16x128xbf16>
    tpu.vector_store %arg7[%c96, %c0_31], %51 {strides = array<i32>} : memref<112x128xbf16, #tpu.memory_space<vmem>>, vector<16x128xbf16>,
    %53 = arith.truncf %48 : vector<80x128xf32> to vector<80x128xbf16>
    %c16 = arith.constant 16 : index
    %c0_32 = arith.constant 0 : index
    %54 = vector.load %arg7[%c16, %c0_32] : memref<112x128xbf16, #tpu.memory_space<vmem>>, vector<80x128xbf16>
    tpu.vector_store %arg7[%c16, %c0_32], %53 {strides = array<i32>} : memref<112x128xbf16, #tpu.memory_space<vmem>>, vector<80x128xbf16>,
    %c5 = arith.constant 5 : index
    %c0_33 = arith.constant 0 : index
    %55 = vector.load %arg7[%c5, %c0_33] : memref<112x128xbf16, #tpu.memory_space<vmem>>, vector<80x128xbf16>
    %c6 = arith.constant 6 : index
    %c0_34 = arith.constant 0 : index
    %56 = vector.load %arg7[%c6, %c0_34] : memref<112x128xbf16, #tpu.memory_space<vmem>>, vector<80x128xbf16>
    %c7 = arith.constant 7 : index
    %c0_35 = arith.constant 0 : index
    %57 = vector.load %arg7[%c7, %c0_35] : memref<112x128xbf16, #tpu.memory_space<vmem>>, vector<80x128xbf16>
    %c15 = arith.constant 15 : index
    %c0_36 = arith.constant 0 : index
    %58 = vector.load %arg7[%c15, %c0_36] : memref<112x128xbf16, #tpu.memory_space<vmem>>, vector<80x128xbf16>
    %c16_37 = arith.constant 16 : index
    %c0_38 = arith.constant 0 : index
    %59 = vector.load %arg7[%c16_37, %c0_38] : memref<112x128xbf16, #tpu.memory_space<vmem>>, vector<80x128xbf16>
    %c17 = arith.constant 17 : index
    %c0_39 = arith.constant 0 : index
    %60 = vector.load %arg7[%c17, %c0_39] : memref<112x128xbf16, #tpu.memory_space<vmem>>, vector<80x128xbf16>
    %c25 = arith.constant 25 : index
    %c0_40 = arith.constant 0 : index
    %61 = vector.load %arg7[%c25, %c0_40] : memref<112x128xbf16, #tpu.memory_space<vmem>>, vector<80x128xbf16>
    %c26 = arith.constant 26 : index
    %c0_41 = arith.constant 0 : index
    %62 = vector.load %arg7[%c26, %c0_41] : memref<112x128xbf16, #tpu.memory_space<vmem>>, vector<80x128xbf16>
    %c27 = arith.constant 27 : index
    %c0_42 = arith.constant 0 : index
    %63 = vector.load %arg7[%c27, %c0_42] : memref<112x128xbf16, #tpu.memory_space<vmem>>, vector<80x128xbf16>
    %64 = tpu.concatenate %55, %56, %57, %58, %59, %60, %61, %62, %63 in 1 : vector<80x128xbf16>, vector<80x128xbf16>, vector<80x128xbf16>, vector<80x128xbf16>, vector<80x128xbf16>, vector<80x128xbf16>, vector<80x128xbf16>, vector<80x128xbf16>, vector<80x128xbf16> -> vector<80x1152xbf16>
    %c0_43 = arith.constant 0 : index
    %c0_44 = arith.constant 0 : index
    %65 = vector.load %arg4[%c0_43, %c0_44] : memref<1152x8xbf16, #tpu.memory_space<vmem>>, vector<1152x8xbf16>
    %cst_45 = arith.constant dense<0.000000e+00> : vector<80x8xf32>
    %66 = tpu.matmul %64, %65, %cst_45 {dimension_numbers = #tpu.dot_dimension_numbers<[1], [0], [0], [1], [0, 0, 1, 1], [], []>} : vector<80x1152xbf16>, vector<1152x8xbf16>, vector<80x8xf32> -> vector<80x8xf32>
    %c0_46 = arith.constant 0 : index
    %c0_47 = arith.constant 0 : index
    %67 = vector.load %arg5[%c0_46, %c0_47] : memref<1x8xf32, #tpu.memory_space<vmem>>, vector<1x8xf32>
    %68 = vector.broadcast %67 : vector<1x8xf32> to vector<80x8xf32>
    %69 = arith.addf %66, %68 : vector<80x8xf32>
    %cst_48 = arith.constant 0.000000e+00 : f32
    %70 = vector.broadcast %cst_48 : f32 to vector<80x8xf32>
    %71 = arith.maximumf %69, %70 : vector<80x8xf32>
    %c0_49 = arith.constant 0 : index
    %c0_50 = arith.constant 0 : index
    %c0_51 = arith.constant 0 : index
    %72 = vector.load %arg6[%c0_49, %c0_50, %c0_51] : memref<1x80x8xf32, #tpu.memory_space<vmem>>, vector<1x80x8xf32>
    %73 = vector.shape_cast %72 : vector<1x80x8xf32> to vector<80x8xf32>
    %74 = vector.shape_cast %71 : vector<80x8xf32> to vector<1x80x8xf32>
    tpu.vector_store %arg6[%c0_49, %c0_50, %c0_51], %74 {strides = array<i32>} : memref<1x80x8xf32, #tpu.memory_space<vmem>>, vector<1x80x8xf32>,
    return
  }
  func.func @transform_0(%arg0: i32) -> (i32, i32, i32) {
    %c0_i32 = arith.constant 0 : i32
    %c0_i32_0 = arith.constant 0 : i32
    %c0_i32_1 = arith.constant 0 : i32
    return %arg0, %c0_i32, %c0_i32_0 : i32, i32, i32
  }
  func.func @transform_1(%arg0: i32) -> (i32, i32) {
    %c0_i32 = arith.constant 0 : i32
    %c0_i32_0 = arith.constant 0 : i32
    %c0_i32_1 = arith.constant 0 : i32
    return %c0_i32, %c0_i32_0 : i32, i32
  }
  func.func @transform_2(%arg0: i32) -> (i32, i32) {
    %c0_i32 = arith.constant 0 : i32
    %c0_i32_0 = arith.constant 0 : i32
    %c0_i32_1 = arith.constant 0 : i32
    return %c0_i32, %c0_i32_0 : i32, i32
  }
  func.func @transform_3(%arg0: i32) -> (i32, i32) {
    %c0_i32 = arith.constant 0 : i32
    %c0_i32_0 = arith.constant 0 : i32
    %c0_i32_1 = arith.constant 0 : i32
    return %c0_i32, %c0_i32_0 : i32, i32
  }
  func.func @transform_4(%arg0: i32) -> (i32, i32) {
    %c0_i32 = arith.constant 0 : i32
    %c0_i32_0 = arith.constant 0 : i32
    %c0_i32_1 = arith.constant 0 : i32
    return %c0_i32, %c0_i32_0 : i32, i32
  }
  func.func @transform_5(%arg0: i32) -> (i32, i32, i32) {
    %c0_i32 = arith.constant 0 : i32
    %c0_i32_0 = arith.constant 0 : i32
    %c0_i32_1 = arith.constant 0 : i32
    return %arg0, %c0_i32, %c0_i32_0 : i32, i32, i32
  }
}

</mosaic_0001>

<llo_original>
// kernel: down_forward.1
$region0: #{down_forward.1}
  #allocation0 [shape = 'u32[]', space=smem, size = 0x4, offset = 0x4, fixed_abs, tag = 'smem constant byte address 0x4 - core index']
  #allocation1 [shape = 'u32[144,128]{1,0:T(1,128)}', space=vmem, size = 0x12000, scoped, tag = 'internal scratch']
  #allocation2 [shape = 'bf16[112,128]{1,0:T(16,128)(2,1)}', space=vmem, size = 0x7000, scoped, tag = 'scratch operand']
  %s0 = inlined_call_operand.vmem [shape: bf16[2,104,4], index: 0, kind: input, shape index: {}]
  %s1 = inlined_call_operand.vmem [shape: bf16[36,128], index: 1, kind: input, shape index: {}]
  %s2 = inlined_call_operand.vmem [shape: f32[1,128], index: 2, kind: input, shape index: {}]
  %s3 = inlined_call_operand.vmem [shape: bf16[1152,8], index: 3, kind: input, shape index: {}]
  %s4 = inlined_call_operand.vmem [shape: f32[1,8], index: 4, kind: input, shape index: {}]
  %s5 = inlined_call_operand.vmem [shape: f32[2,80,8], index: 5, kind: output, shape index: {}]
  %s6 = sld [smem:[#allocation0]]
  $region53: #{down_forward.1} parent=0
    _
  %s8 = ssub.s32 1, %s6
  %s9 = scalar_select 0, %s8, %s6
  loop: start=0, step=1, limit=4
  $region2: #{down_forward.1} parent=0 // loop_pre_header
    _
  $region3: #{down_forward.1} parent=0 // loop_header
    %s11 = sphi 0, %s15
    %p12 = scmp.ge.s32.totalorder %s11, 4
    %s21 = sphi 0, %s23
    %s24 = sphi 0, %s21
    %s25 = sphi 0, %s24
    %s41 = sphi 0, %s25
    %s45 = sphi 0, %s45
    %s47 = sphi 0, %s45
    %s48 = sphi 0, %s47
    %s62 = sphi 0, %s48
    %s66 = sphi 0, %s66
    %s68 = sphi 0, %s66
    %s69 = sphi 0, %s68
    %s83 = sphi 0, %s69
    %s87 = sphi 0, %s87
    %s89 = sphi 0, %s87
    %s90 = sphi 0, %s89
    %s104 = sphi 0, %s90
    %s108 = sphi 0, %s108
    %s110 = sphi 0, %s108
    %s111 = sphi 0, %s110
    %s125 = sphi 0, %s111
    %s131 = sphi 0, %s133
    %s134 = sphi 0, %s131
    %s135 = sphi 0, %s134
    %s151 = sphi 0, %s135
  $region4: #{down_forward.1} parent=0 // loop_header_branch
    %14 = sbr.rel (%p12) target = $region8
  $region5: #{down_forward.1} parent=0 // loop_body
    %s16 = ssub.s32 %s11, 1
    %s17 = ssub.s32 %s11, 2
    %s18 = sadd.s32 %s11, 1
    %s19 = ssub.s32 %s11, %s18
    %p20 = scmp.eq.s32.totalorder %s19, 0
    %s22 = sadd.s32 %s21, 1
    %s23 = scalar_select %p20, %s21, %s22
    %p26 = pneg %p20
    %p27 = scmp.eq.s32.totalorder %s11, 1
    %p28 = por %p26, %p27
    %p29 = scmp.ne.s32.totalorder %s21, %s24
    %p30 = scmp.eq.s32.totalorder %s11, 0
    %p31 = por %p29, %p30
    %p32 = scmp.ne.s32.totalorder %s21, %s24
    %p33 = scmp.eq.s32.totalorder %s16, 1
    %p34 = por %p32, %p33
    %p35 = scmp.ne.s32.totalorder %s24, %s25
    %p36 = scmp.eq.s32.totalorder %s16, 0
    %p37 = por %p35, %p36
    %p38 = scmp.ne.s32.totalorder %s24, %s25
    %p39 = scmp.eq.s32.totalorder %s17, 1
    %p40 = por %p38, %p39
    %p42 = scmp.ne.s32.totalorder %s25, %s41
    %p43 = scmp.eq.s32.totalorder %s17, 0
    %p44 = por %p42, %p43
    %s46 = sadd.s32 %s45, 1
    %p49 = scmp.eq.s32.totalorder %s11, 1
    %p50 = scmp.ne.s32.totalorder %s45, %s47
    %p51 = scmp.eq.s32.totalorder %s11, 0
    %p52 = por %p50, %p51
    %p53 = scmp.ne.s32.totalorder %s45, %s47
    %p54 = scmp.eq.s32.totalorder %s16, 1
    %p55 = por %p53, %p54
    %p56 = scmp.ne.s32.totalorder %s47, %s48
    %p57 = scmp.eq.s32.totalorder %s16, 0
    %p58 = por %p56, %p57
    %p59 = scmp.ne.s32.totalorder %s47, %s48
    %p60 = scmp.eq.s32.totalorder %s17, 1
    %p61 = por %p59, %p60
    %p63 = scmp.ne.s32.totalorder %s48, %s62
    %p64 = scmp.eq.s32.totalorder %s17, 0
    %p65 = por %p63, %p64
    %s67 = sadd.s32 %s66, 1
    %p70 = scmp.eq.s32.totalorder %s11, 1
    %p71 = scmp.ne.s32.totalorder %s66, %s68
    %p72 = scmp.eq.s32.totalorder %s11, 0
    %p73 = por %p71, %p72
    %p74 = scmp.ne.s32.totalorder %s66, %s68
    %p75 = scmp.eq.s32.totalorder %s16, 1
    %p76 = por %p74, %p75
    %p77 = scmp.ne.s32.totalorder %s68, %s69
    %p78 = scmp.eq.s32.totalorder %s16, 0
    %p79 = por %p77, %p78
    %p80 = scmp.ne.s32.totalorder %s68, %s69
    %p81 = scmp.eq.s32.totalorder %s17, 1
    %p82 = por %p80, %p81
    %p84 = scmp.ne.s32.totalorder %s69, %s83
    %p85 = scmp.eq.s32.totalorder %s17, 0
    %p86 = por %p84, %p85
    %s88 = sadd.s32 %s87, 1
    %p91 = scmp.eq.s32.totalorder %s11, 1
    %p92 = scmp.ne.s32.totalorder %s87, %s89
    %p93 = scmp.eq.s32.totalorder %s11, 0
    %p94 = por %p92, %p93
    %p95 = scmp.ne.s32.totalorder %s87, %s89
    %p96 = scmp.eq.s32.totalorder %s16, 1
    %p97 = por %p95, %p96
    %p98 = scmp.ne.s32.totalorder %s89, %s90
    %p99 = scmp.eq.s32.totalorder %s16, 0
    %p100 = por %p98, %p99
    %p101 = scmp.ne.s32.totalorder %s89, %s90
    %p102 = scmp.eq.s32.totalorder %s17, 1
    %p103 = por %p101, %p102
    %p105 = scmp.ne.s32.totalorder %s90, %s104
    %p106 = scmp.eq.s32.totalorder %s17, 0
    %p107 = por %p105, %p106
    %s109 = sadd.s32 %s108, 1
    %p112 = scmp.eq.s32.totalorder %s11, 1
    %p113 = scmp.ne.s32.totalorder %s108, %s110
    %p114 = scmp.eq.s32.totalorder %s11, 0
    %p115 = por %p113, %p114
    %p116 = scmp.ne.s32.totalorder %s108, %s110
    %p117 = scmp.eq.s32.totalorder %s16, 1
    %p118 = por %p116, %p117
    %p119 = scmp.ne.s32.totalorder %s110, %s111
    %p120 = scmp.eq.s32.totalorder %s16, 0
    %p121 = por %p119, %p120
    %p122 = scmp.ne.s32.totalorder %s110, %s111
    %p123 = scmp.eq.s32.totalorder %s17, 1
    %p124 = por %p122, %p123
    %p126 = scmp.ne.s32.totalorder %s111, %s125
    %p127 = scmp.eq.s32.totalorder %s17, 0
    %p128 = por %p126, %p127
    %s129 = ssub.s32 %s11, %s18
    %p130 = scmp.eq.s32.totalorder %s129, 0
    %s132 = sadd.s32 %s131, 1
    %s133 = scalar_select %p130, %s131, %s132
    %p136 = pneg %p130
    %p137 = scmp.eq.s32.totalorder %s11, 1
    %p138 = por %p136, %p137
    %p139 = scmp.ne.s32.totalorder %s131, %s134
    %p140 = scmp.eq.s32.totalorder %s11, 0
    %p141 = por %p139, %p140
    %p142 = scmp.ne.s32.totalorder %s131, %s134
    %p143 = scmp.eq.s32.totalorder %s16, 1
    %p144 = por %p142, %p143
    %p145 = scmp.ne.s32.totalorder %s134, %s135
    %p146 = scmp.eq.s32.totalorder %s16, 0
    %p147 = por %p145, %p146
    %p148 = scmp.ne.s32.totalorder %s134, %s135
    %p149 = scmp.eq.s32.totalorder %s17, 1
    %p150 = por %p148, %p149
    %p152 = scmp.ne.s32.totalorder %s135, %s151
    %p153 = scmp.eq.s32.totalorder %s17, 0
    %p154 = por %p152, %p153
    %p155 = scmp.le.s32.totalorder 1, %s11
    %p156 = scmp.lt.s32.totalorder %s11, 3
    %p157 = pnand %p155, %p156
    %p158 = pneg %p157
    // Predicated region
    $region9: #{down_forward.1} parent=5 // pred_check
      _
    $region10: #{down_forward.1} parent=5 // pred_check_branch
      %160 = sbr.rel (%p157) target = $region12
    $region11: #{down_forward.1} parent=5 // pred_region
      %s161 = ssub.s32 %s11, 1
      // Predicated region
      $region13: #{down_forward.1} parent=11 // pred_check
        %p162 = pneg %p58
      $region14: #{down_forward.1} parent=11 // pred_check_branch
        %164 = sbr.rel (%p162) target = $region16
      $region15: #{down_forward.1} parent=11 // pred_region
        _
      $region16: #{down_forward.1} parent=11 // pred_fallthru
        _
      // Predicated region
      $region17: #{down_forward.1} parent=11 // pred_check
        %p165 = pneg %p79
      $region18: #{down_forward.1} parent=11 // pred_check_branch
        %167 = sbr.rel (%p165) target = $region20
      $region19: #{down_forward.1} parent=11 // pred_region
        _
      $region20: #{down_forward.1} parent=11 // pred_fallthru
        _
      // Predicated region
      $region21: #{down_forward.1} parent=11 // pred_check
        %p168 = pneg %p100
      $region22: #{down_forward.1} parent=11 // pred_check_branch
        %170 = sbr.rel (%p168) target = $region24
      $region23: #{down_forward.1} parent=11 // pred_region
        _
      $region24: #{down_forward.1} parent=11 // pred_fallthru
        _
      // Predicated region
      $region25: #{down_forward.1} parent=11 // pred_check
        %p171 = pneg %p121
      $region26: #{down_forward.1} parent=11 // pred_check_branch
        %173 = sbr.rel (%p171) target = $region28
      $region27: #{down_forward.1} parent=11 // pred_region
        _
      $region28: #{down_forward.1} parent=11 // pred_fallthru
        _
    $region12: #{down_forward.1} parent=5 // pred_fallthru
      _
    %p174 = scmp.lt.s32.totalorder %s11, 2
    // Predicated region
    $region29: #{down_forward.1} parent=5 // pred_check
      %p175 = pneg %p174
    $region30: #{down_forward.1} parent=5 // pred_check_branch
      %177 = sbr.rel (%p175) target = $region32
    $region31: #{down_forward.1} parent=5 // pred_region
      // Predicated region
      $region33: #{down_forward.1} parent=31 // pred_check
        %p178 = pneg %p31
      $region34: #{down_forward.1} parent=31 // pred_check_branch
        %180 = sbr.rel (%p178) target = $region36
      $region35: #{down_forward.1} parent=31 // pred_region
        %p181 = scmp.lt.s32.totalorder %s11, 1
        %s182 = scalar_select %p181, %s11, 1
        %s183 = smul.addr %s182, 13
        %s184 = smul.addr %s183, 4
        %s185 = scalar_lea.vmem %s0, %s184
      $region36: #{down_forward.1} parent=31 // pred_fallthru
        _
    $region32: #{down_forward.1} parent=5 // pred_fallthru
      _
    %p186 = scmp.le.s32.totalorder 1, %s11
    %p187 = scmp.lt.s32.totalorder %s11, 3
    %p188 = pnand %p186, %p187
    %p189 = pneg %p188
    // Predicated region
    $region37: #{down_forward.1} parent=5 // pred_check
      _
    $region38: #{down_forward.1} parent=5 // pred_check_branch
      %191 = sbr.rel (%p188) target = $region40
    $region39: #{down_forward.1} parent=5 // pred_region
      %s192 = ssub.s32 %s11, 1
      %p193 = scmp.lt.s32.totalorder %s16, 1
      %s194 = scalar_select %p193, %s16, 1
      %s195 = smul.addr %s194, 13
      %s196 = smul.addr %s195, 4
      %s197 = scalar_lea.vmem %s0, %s196
      %p198 = pneg %p37
      %p199 = pneg %p34
      %p200 = pneg %p58
      %p201 = pneg %p55
      %p202 = pneg %p79
      %p203 = pneg %p76
      %p204 = pneg %p100
      %p205 = pneg %p97
      %p206 = pneg %p121
      %p207 = pneg %p118
      %p208 = pneg %p147
      %p209 = pneg %p144
      %p210 = scmp.lt.s32.totalorder %s16, 1
      %s211 = scalar_select %p210, %s16, 1
      %s212 = smul.addr %s211, 10
      %s213 = smul.addr %s212, 8
      %s214 = scalar_lea.vmem %s5, %s213
      %p215 = scmp.lt.s32.totalorder %s16, 1
      %s216 = scalar_select %p215, %s16, 1
      %s217 = smul.addr %s216, 13
      %s218 = smul.addr %s217, 4
      %s219 = scalar_lea.vmem %s0, %s218
      %p220 = scmp.lt.s32.totalorder %s16, 1
      %s221 = scalar_select %p220, %s16, 1
      %s222 = smul.addr %s221, 10
      %s223 = smul.addr %s222, 8
      %s224 = scalar_lea.vmem %s5, %s223
      %v226 = vld [vmem:[%s219] sm:$0xf]
      %v227 = vld [vmem:[%s219 + $0x4] sm:$0xf]
      %v228 = vld [vmem:[%s219 + $0x8] sm:$0xf]
      %v229 = vld [vmem:[%s219 + $0xc] sm:$0xf]
      %v230 = vld [vmem:[%s219 + $0x10] sm:$0xf]
      %v231 = vld [vmem:[%s219 + $0x14] sm:$0xf]
      %v232 = vld [vmem:[%s219 + $0x18] sm:$0xf]
      %v233 = vld [vmem:[%s219 + $0x1c] sm:$0xf]
      %v234 = vld [vmem:[%s219 + $0x20] sm:$0xf]
      %v235 = vld [vmem:[%s219 + $0x24] sm:$0xf]
      %v236 = vld [vmem:[%s219 + $0x28] sm:$0x1]
      %v237 = vld [vmem:[%s219] sm:$0xe]
      %v238 = vld [vmem:[%s219 + $0x4] sm:$0xe]
      %v239 = vld [vmem:[%s219 + $0x28] sm:$0xf]
      %v240 = vld [vmem:[%s219 + $0x2c] sm:$0x1]
      %v241 = vld [vmem:[%s219 + $0x2c] sm:$0x3]
      %v242 = vld [vmem:[%s219 + $0x4] sm:$0xc]
      %v243 = vld [vmem:[%s219 + $0x8] sm:$0xc]
      %v244 = vld [vmem:[%s219 + $0x2c] sm:$0xf]
      %v245 = vld [vmem:[%s219 + $0x30] sm:$0x3]
      %v246 = vld [vmem:[%s219 + $0x30] sm:$0x7]
      %v247 = vld [vmem:[%s219 + $0x8] sm:$0x8]
      %v258 = vunpack.c.l.b16 %v226
      %v259 = vunpack.c.l.b16 %v227
      %v260 = vunpack.c.l.b16 %v228
      %v261 = vunpack.c.l.b16 %v229
      %v262 = vunpack.c.l.b16 %v230
      %v263 = vunpack.c.l.b16 %v231
      %v264 = vunpack.c.l.b16 %v232
      %v265 = vunpack.c.l.b16 %v233
      %v266 = vunpack.c.l.b16 %v234
      %v267 = vunpack.c.l.b16 %v235
      %v268 = vpack.c.b16 %v259, %v258
      %v269 = vpack.c.b16 %v261, %v260
      %v270 = vpack.c.b16 %v263, %v262
      %v271 = vpack.c.b16 %v265, %v264
      %v272 = vpack.c.b16 %v267, %v266
      %v274 = vunpack.c.l.b16 %v236
      %v275 = vpack.c.b16 %v274, %v274
      %vm276 = vsmask.f32 7424
      %v278 = vshrl.u32 %v268, 16
      %v280 = vshll.u32 %v268, 16
      %v282 = vrot.slane %v280, 1
      %v283 = vor.u32 %v278, %v282
      %v285 = vshll.u32 %v269, 16
      %v287 = vrot.slane %v285, 1
      %v288 = vsel %vm276, %v283, %v287
      %v289 = vshrl.u32 %v269, 16
      %v291 = vor.u32 %v289, %v287
      %v293 = vshll.u32 %v270, 16
      %v295 = vrot.slane %v293, 1
      %v296 = vsel %vm276, %v291, %v295
      %v297 = vshrl.u32 %v270, 16
      %v299 = vor.u32 %v297, %v295
      %v301 = vshll.u32 %v271, 16
      %v303 = vrot.slane %v301, 1
      %v304 = vsel %vm276, %v299, %v303
      %v305 = vshrl.u32 %v271, 16
      %v307 = vor.u32 %v305, %v303
      %v309 = vshll.u32 %v272, 16
      %v311 = vrot.slane %v309, 1
      %v312 = vsel %vm276, %v307, %v311
      %v313 = vshrl.u32 %v272, 16
      %v315 = vor.u32 %v313, %v311
      %v317 = vshll.u32 %v275, 16
      %v319 = vrot.slane %v317, 1
      %v320 = vsel %vm276, %v315, %v319
      %321 = vrot.lane.b32.xlu0 %v288, 4
      %v322 = vpop.permute.xlu0 %321
      %323 = vrot.lane.b32.xlu0 %v296, 4
      %v324 = vpop.permute.xlu0 %323
      %325 = vrot.lane.b32.xlu0 %v304, 4
      %v326 = vpop.permute.xlu0 %325
      %327 = vrot.lane.b32.xlu0 %v312, 4
      %v328 = vpop.permute.xlu0 %327
      %329 = vrot.lane.b32.xlu0 %v320, 4
      %v330 = vpop.permute.xlu0 %329
      %v332 = vunpack.c.l.b16 %v237
      %v333 = vpack.c.b16 %v259, %v332
      %vm334 = vcmask 1046528
      %v335 = vrot.slane %v333, 1
      %v336 = vrot.slane %v269, 1
      %v337 = vsel %vm334, %v335, %v336
      %v338 = vrot.slane %v270, 1
      %v339 = vsel %vm334, %v336, %v338
      %v340 = vrot.slane %v271, 1
      %v341 = vsel %vm334, %v338, %v340
      %v342 = vrot.slane %v272, 1
      %v343 = vsel %vm334, %v340, %v342
      %v344 = vrot.slane %v275, 1
      %v345 = vsel %vm334, %v342, %v344
      %346 = vrot.lane.b32.xlu0 %v337, 8
      %v347 = vpop.permute.xlu0 %346
      %348 = vrot.lane.b32.xlu0 %v339, 8
      %v349 = vpop.permute.xlu0 %348
      %350 = vrot.lane.b32.xlu0 %v341, 8
      %v351 = vpop.permute.xlu0 %350
      %352 = vrot.lane.b32.xlu0 %v343, 8
      %v353 = vpop.permute.xlu0 %352
      %354 = vrot.lane.b32.xlu0 %v345, 8
      %v355 = vpop.permute.xlu0 %354
      %v359 = vunpack.c.l.b16 %v238
      %v360 = vunpack.c.l.b16 %v239
      %v361 = vunpack.c.l.b16 %v240
      %v362 = vpack.c.b16 %v260, %v359
      %v363 = vpack.c.b16 %v262, %v261
      %v364 = vpack.c.b16 %v264, %v263
      %v365 = vpack.c.b16 %v266, %v265
      %v366 = vpack.c.b16 %v360, %v267
      %v367 = vpack.c.b16 %v361, %v361
      %v368 = vrot.slane %v362, 1
      %v369 = vrot.slane %v363, 1
      %v370 = vsel %vm334, %v368, %v369
      %v371 = vrot.slane %v364, 1
      %v372 = vsel %vm334, %v369, %v371
      %v373 = vrot.slane %v365, 1
      %v374 = vsel %vm334, %v371, %v373
      %v375 = vrot.slane %v366, 1
      %v376 = vsel %vm334, %v373, %v375
      %v377 = vrot.slane %v367, 1
      %v378 = vsel %vm334, %v375, %v377
      %379 = vrot.lane.b32.xlu0 %v370, 12
      %v380 = vpop.permute.xlu0 %379
      %381 = vrot.lane.b32.xlu0 %v372, 12
      %v382 = vpop.permute.xlu0 %381
      %383 = vrot.lane.b32.xlu0 %v374, 12
      %v384 = vpop.permute.xlu0 %383
      %385 = vrot.lane.b32.xlu0 %v376, 12
      %v386 = vpop.permute.xlu0 %385
      %387 = vrot.lane.b32.xlu0 %v378, 12
      %v388 = vpop.permute.xlu0 %387
      %v390 = vunpack.c.l.b16 %v241
      %v391 = vpack.c.b16 %v390, %v390
      %vm392 = vsmask.f32 6400
      %v394 = vshrl.u32 %v362, 16
      %v396 = vrot.slane %v394, 1
      %v397 = vshll.u32 %v362, 16
      %v399 = vrot.slane %v397, 2
      %v400 = vor.u32 %v396, %v399
      %v402 = vshrl.u32 %v363, 16
      %v404 = vrot.slane %v402, 1
      %v405 = vshll.u32 %v363, 16
      %v407 = vrot.slane %v405, 2
      %v408 = vor.u32 %v404, %v407
      %v409 = vsel %vm392, %v400, %v408
      %v411 = vshrl.u32 %v364, 16
      %v413 = vrot.slane %v411, 1
      %v414 = vshll.u32 %v364, 16
      %v416 = vrot.slane %v414, 2
      %v417 = vor.u32 %v413, %v416
      %v418 = vsel %vm392, %v408, %v417
      %v420 = vshrl.u32 %v365, 16
      %v422 = vrot.slane %v420, 1
      %v423 = vshll.u32 %v365, 16
      %v425 = vrot.slane %v423, 2
      %v426 = vor.u32 %v422, %v425
      %v427 = vsel %vm392, %v417, %v426
      %v429 = vshrl.u32 %v366, 16
      %v431 = vrot.slane %v429, 1
      %v432 = vshll.u32 %v366, 16
      %v434 = vrot.slane %v432, 2
      %v435 = vor.u32 %v431, %v434
      %v436 = vsel %vm392, %v426, %v435
      %v438 = vshrl.u32 %v391, 16
      %v440 = vrot.slane %v438, 1
      %v441 = vshll.u32 %v391, 16
      %v443 = vrot.slane %v441, 2
      %v444 = vor.u32 %v440, %v443
      %v445 = vsel %vm392, %v435, %v444
      %446 = vrot.lane.b32.xlu0 %v409, 16
      %v447 = vpop.permute.xlu0 %446
      %448 = vrot.lane.b32.xlu0 %v418, 16
      %v449 = vpop.permute.xlu0 %448
      %450 = vrot.lane.b32.xlu0 %v427, 16
      %v451 = vpop.permute.xlu0 %450
      %452 = vrot.lane.b32.xlu0 %v436, 16
      %v453 = vpop.permute.xlu0 %452
      %454 = vrot.lane.b32.xlu0 %v445, 16
      %v455 = vpop.permute.xlu0 %454
      %v457 = vunpack.c.l.b16 %v242
      %v458 = vpack.c.b16 %v260, %v457
      %vm459 = vcmask 1045504
      %v460 = vrot.slane %v458, 2
      %v461 = vrot.slane %v363, 2
      %v462 = vsel %vm459, %v460, %v461
      %v463 = vrot.slane %v364, 2
      %v464 = vsel %vm459, %v461, %v463
      %v465 = vrot.slane %v365, 2
      %v466 = vsel %vm459, %v463, %v465
      %v467 = vrot.slane %v366, 2
      %v468 = vsel %vm459, %v465, %v467
      %v469 = vrot.slane %v391, 2
      %v470 = vsel %vm459, %v467, %v469
      %471 = vrot.lane.b32.xlu0 %v462, 20
      %v472 = vpop.permute.xlu0 %471
      %473 = vrot.lane.b32.xlu0 %v464, 20
      %v474 = vpop.permute.xlu0 %473
      %475 = vrot.lane.b32.xlu0 %v466, 20
      %v476 = vpop.permute.xlu0 %475
      %477 = vrot.lane.b32.xlu0 %v468, 20
      %v478 = vpop.permute.xlu0 %477
      %479 = vrot.lane.b32.xlu0 %v470, 20
      %v480 = vpop.permute.xlu0 %479
      %v484 = vunpack.c.l.b16 %v243
      %v485 = vunpack.c.l.b16 %v244
      %v486 = vunpack.c.l.b16 %v245
      %v487 = vpack.c.b16 %v261, %v484
      %v488 = vpack.c.b16 %v485, %v360
      %v489 = vpack.c.b16 %v486, %v486
      %v490 = vrot.slane %v487, 2
      %v491 = vrot.slane %v270, 2
      %v492 = vsel %vm459, %v490, %v491
      %v493 = vrot.slane %v271, 2
      %v494 = vsel %vm459, %v491, %v493
      %v495 = vrot.slane %v272, 2
      %v496 = vsel %vm459, %v493, %v495
      %v497 = vrot.slane %v488, 2
      %v498 = vsel %vm459, %v495, %v497
      %v499 = vrot.slane %v489, 2
      %v500 = vsel %vm459, %v497, %v499
      %501 = vrot.lane.b32.xlu0 %v492, 24
      %v502 = vpop.permute.xlu0 %501
      %503 = vrot.lane.b32.xlu0 %v494, 24
      %v504 = vpop.permute.xlu0 %503
      %505 = vrot.lane.b32.xlu0 %v496, 24
      %v506 = vpop.permute.xlu0 %505
      %507 = vrot.lane.b32.xlu0 %v498, 24
      %v508 = vpop.permute.xlu0 %507
      %509 = vrot.lane.b32.xlu0 %v500, 24
      %v510 = vpop.permute.xlu0 %509
      %v512 = vunpack.c.l.b16 %v246
      %v513 = vpack.c.b16 %v512, %v512
      %vm514 = vsmask.f32 5376
      %v516 = vshrl.u32 %v487, 16
      %v518 = vrot.slane %v516, 2
      %v519 = vshll.u32 %v487, 16
      %v521 = vrot.slane %v519, 3
      %v522 = vor.u32 %v518, %v521
      %v523 = vrot.slane %v297, 2
      %v524 = vrot.slane %v293, 3
      %v525 = vor.u32 %v523, %v524
      %v526 = vsel %vm514, %v522, %v525
      %v527 = vrot.slane %v305, 2
      %v528 = vrot.slane %v301, 3
      %v529 = vor.u32 %v527, %v528
      %v530 = vsel %vm514, %v525, %v529
      %v531 = vrot.slane %v313, 2
      %v532 = vrot.slane %v309, 3
      %v533 = vor.u32 %v531, %v532
      %v534 = vsel %vm514, %v529, %v533
      %v536 = vshrl.u32 %v488, 16
      %v538 = vrot.slane %v536, 2
      %v539 = vshll.u32 %v488, 16
      %v541 = vrot.slane %v539, 3
      %v542 = vor.u32 %v538, %v541
      %v543 = vsel %vm514, %v533, %v542
      %v545 = vshrl.u32 %v513, 16
      %v547 = vrot.slane %v545, 2
      %v548 = vshll.u32 %v513, 16
      %v550 = vrot.slane %v548, 3
      %v551 = vor.u32 %v547, %v550
      %v552 = vsel %vm514, %v542, %v551
      %553 = vrot.lane.b32.xlu0 %v526, 28
      %v554 = vpop.permute.xlu0 %553
      %555 = vrot.lane.b32.xlu0 %v530, 28
      %v556 = vpop.permute.xlu0 %555
      %557 = vrot.lane.b32.xlu0 %v534, 28
      %v558 = vpop.permute.xlu0 %557
      %559 = vrot.lane.b32.xlu0 %v543, 28
      %v560 = vpop.permute.xlu0 %559
      %561 = vrot.lane.b32.xlu0 %v552, 28
      %v562 = vpop.permute.xlu0 %561
      %v564 = vunpack.c.l.b16 %v247
      %v565 = vpack.c.b16 %v261, %v564
      %vm566 = vcmask 1044480
      %v567 = vrot.slane %v565, 3
      %v568 = vrot.slane %v270, 3
      %v569 = vsel %vm566, %v567, %v568
      %v570 = vrot.slane %v271, 3
      %v571 = vsel %vm566, %v568, %v570
      %v572 = vrot.slane %v272, 3
      %v573 = vsel %vm566, %v570, %v572
      %v574 = vrot.slane %v488, 3
      %v575 = vsel %vm566, %v572, %v574
      %v576 = vrot.slane %v513, 3
      %v577 = vsel %vm566, %v574, %v576
      %578 = vrot.lane.b32.xlu0 %v569, 32
      %v579 = vpop.permute.xlu0 %578
      %580 = vrot.lane.b32.xlu0 %v571, 32
      %v581 = vpop.permute.xlu0 %580
      %582 = vrot.lane.b32.xlu0 %v573, 32
      %v583 = vpop.permute.xlu0 %582
      %584 = vrot.lane.b32.xlu0 %v575, 32
      %v585 = vpop.permute.xlu0 %584
      %586 = vrot.lane.b32.xlu0 %v577, 32
      %v587 = vpop.permute.xlu0 %586
      %vm588 = vcmask 31744
      %v590 = vsel %vm588, %v268, %v322
      %v592 = vsel %vm588, %v269, %v324
      %v594 = vsel %vm588, %v270, %v326
      %v596 = vsel %vm588, %v271, %v328
      %v598 = vsel %vm588, %v272, %v330
      %vm599 = vcmask 64512
      %v601 = vsel %vm599, %v590, %v347
      %v603 = vsel %vm599, %v592, %v349
      %v605 = vsel %vm599, %v594, %v351
      %v607 = vsel %vm599, %v596, %v353
      %v609 = vsel %vm599, %v598, %v355
      %vm610 = vcmask 97280
      %v612 = vsel %vm610, %v601, %v380
      %v614 = vsel %vm610, %v603, %v382
      %v616 = vsel %vm610, %v605, %v384
      %v618 = vsel %vm610, %v607, %v386
      %v620 = vsel %vm610, %v609, %v388
      %vm621 = vcmask 130048
      %v623 = vsel %vm621, %v612, %v447
      %v625 = vsel %vm621, %v614, %v449
      %v627 = vsel %vm621, %v616, %v451
      %v629 = vsel %vm621, %v618, %v453
      %v631 = vsel %vm621, %v620, %v455
      %vm632 = vcmask 162816
      %v634 = vsel %vm632, %v623, %v472
      %v636 = vsel %vm632, %v625, %v474
      %v638 = vsel %vm632, %v627, %v476
      %v640 = vsel %vm632, %v629, %v478
      %v642 = vsel %vm632, %v631, %v480
      %vm643 = vcmask 195584
      %v645 = vsel %vm643, %v634, %v502
      %v647 = vsel %vm643, %v636, %v504
      %v649 = vsel %vm643, %v638, %v506
      %v651 = vsel %vm643, %v640, %v508
      %v653 = vsel %vm643, %v642, %v510
      %vm654 = vcmask 228352
      %v656 = vsel %vm654, %v645, %v554
      %v658 = vsel %vm654, %v647, %v556
      %v660 = vsel %vm654, %v649, %v558
      %v662 = vsel %vm654, %v651, %v560
      %v664 = vsel %vm654, %v653, %v562
      %vm665 = vcmask 261120
      %v667 = vsel %vm665, %v656, %v579
      %v669 = vsel %vm665, %v658, %v581
      %v671 = vsel %vm665, %v660, %v583
      %v673 = vsel %vm665, %v662, %v585
      %v675 = vsel %vm665, %v664, %v587
      %v676 = vld [vmem:[%s1] sm:$0xf]
      %v677 = vld [vmem:[%s1 + $0x4] sm:$0xf]
      %v678 = vld [vmem:[%s1 + $0x8] sm:$0xf]
      %v679 = vld [vmem:[%s1 + $0xc] sm:$0xf]
      %v680 = vld [vmem:[%s1 + $0x10] sm:$0x3]
      %v681 = vld [vmem:[%s2] sm:$0x1]
      %v683 = vlaneseq
      %v684 = vshrl.u32 %v683, 7
      %v685 = vsub.s32 0, %v684
      %v686 = vrot.slane %v681, %v685
      %v693 = vunpack.c.l.b16 %v676
      %v694 = vunpack.c.l.b16 %v677
      %v695 = vunpack.c.l.b16 %v678
      %v696 = vunpack.c.l.b16 %v679
      %v697 = vunpack.c.l.b16 %v680
      %v698 = vpack.c.b16 %v694, %v693
      %v699 = vpack.c.b16 %v696, %v695
      %v700 = vpack.c.b16 %v697, %v697
      %vm703 = vcmask 293888
      %v704 = vsel %vm703, %v667, 0
      %v706 = vsel %vm703, %v669, 0
      %v708 = vsel %vm703, %v671, 0
      %v710 = vsel %vm703, %v673, 0
      %v712 = vsel %vm703, %v675, 0
      %vm714 = vcmask 1041408
      %v716 = vsel %vm714, %v700, 0
      %718 = vmatprep.subr.bf16.mxu0 0
      %719 = vmatpush1.bf16.msra.mxu0 %v698
      %720 = vmatprep.subr.bf16.mxu0 0
      %721 = vmatpush1.bf16.msra.mxu0 %v699
      %722 = vmatprep.subr.bf16.mxu0 0
      %723 = vmatpush1.bf16.msra.mxu0 %v716
      %724 = vmatprep.subr.bf16.mxu0 0
      %725 = vmatpush1.bf16.msra.mxu0 0
      %726 = vmatprep.subr.bf16.mxu0 0
      %727 = vmatpush1.bf16.msra.mxu0 0
      %728 = vmatprep.subr.bf16.mxu0 0
      %729 = vmatpush1.bf16.msra.mxu0 0
      %730 = vmatprep.subr.bf16.mxu0 0
      %731 = vmatpush1.bf16.msra.mxu0 0
      %732 = vmatprep.subr.bf16.mxu0 0
      %733 = vmatpush1.bf16.msra.mxu0 0
      %734 = vmatprep.subr.bf16.mxu0 0
      %735 = vmatpush1.bf16.msra.mxu0 0
      %736 = vmatprep.subr.bf16.mxu0 0
      %737 = vmatpush1.bf16.msra.mxu0 0
      %738 = vmatprep.subr.bf16.mxu0 0
      %739 = vmatpush1.bf16.msra.mxu0 0
      %740 = vmatprep.subr.bf16.mxu0 0
      %741 = vmatpush1.bf16.msra.mxu0 0
      %742 = vmatprep.subr.bf16.mxu0 0
      %743 = vmatpush1.bf16.msra.mxu0 0
      %744 = vmatprep.subr.bf16.mxu0 0
      %745 = vmatpush1.bf16.msra.mxu0 0
      %746 = vmatprep.subr.bf16.mxu0 0
      %747 = vmatpush1.bf16.msra.mxu0 0
      %748 = vmatprep.subr.bf16.mxu0 0
      %749 = vmatpush1.bf16.msra.mxu0 0
      %750 = vmatprep.mubr.bf16.mxu0 0
      %751 = vmatmul.mubr.bf16.gmra.mrb[0].mxu0 %v704
      %v752 = vpop.f32.mrb[0].mxu0
      %v753 = vadd.f32 %v686, %v752
      %v754 = vpop.f32.mrb[0].mxu0
      %v755 = vpop.f32.mrb[0].mxu0
      %v756 = vadd.f32 %v686, %v755
      %v757 = vpop.f32.mrb[0].mxu0
      %758 = vmatprep.mubr.bf16.mxu0 0
      %759 = vmatmul.mubr.bf16.gmra.mrb[0].mxu0 %v706
      %v760 = vpop.f32.mrb[0].mxu0
      %v761 = vadd.f32 %v686, %v760
      %v762 = vpop.f32.mrb[0].mxu0
      %v763 = vpop.f32.mrb[0].mxu0
      %v764 = vadd.f32 %v686, %v763
      %v765 = vpop.f32.mrb[0].mxu0
      %766 = vmatprep.mubr.bf16.mxu0 0
      %767 = vmatmul.mubr.bf16.gmra.mrb[0].mxu0 %v708
      %v768 = vpop.f32.mrb[0].mxu0
      %v769 = vadd.f32 %v686, %v768
      %v770 = vpop.f32.mrb[0].mxu0
      %v771 = vpop.f32.mrb[0].mxu0
      %v772 = vadd.f32 %v686, %v771
      %v773 = vpop.f32.mrb[0].mxu0
      %774 = vmatprep.mubr.bf16.mxu0 0
      %775 = vmatmul.mubr.bf16.gmra.mrb[0].mxu0 %v710
      %v776 = vpop.f32.mrb[0].mxu0
      %v777 = vadd.f32 %v686, %v776
      %v778 = vpop.f32.mrb[0].mxu0
      %v779 = vpop.f32.mrb[0].mxu0
      %v780 = vadd.f32 %v686, %v779
      %v781 = vpop.f32.mrb[0].mxu0
      %782 = vmatprep.mubr.bf16.mxu0 0
      %783 = vmatmul.mubr.bf16.gmra.mrb[0].mxu0 %v712
      %v784 = vpop.f32.mrb[0].mxu0
      %v785 = vadd.f32 %v686, %v784
      %v786 = vpop.f32.mrb[0].mxu0
      %v787 = vpop.f32.mrb[0].mxu0
      %v788 = vadd.f32 %v686, %v787
      %v789 = vpop.f32.mrb[0].mxu0
      %790 = vdwg.mxu0
      %v791 = vmax.f32 %v753, 0.0
      %v792 = vmax.f32 %v756, 0.0
      %v793 = vmax.f32 %v761, 0.0
      %v794 = vmax.f32 %v764, 0.0
      %v795 = vmax.f32 %v769, 0.0
      %v796 = vmax.f32 %v772, 0.0
      %v797 = vmax.f32 %v777, 0.0
      %v798 = vmax.f32 %v780, 0.0
      %v799 = vmax.f32 %v785, 0.0
      %v800 = vmax.f32 %v788, 0.0
      %v801 = vlaneseq
      %v802 = vshrl.u32 %v801, 7
      %v803 = vadd.s32 %v802, 8
      %v804 = vadd.s32 %v802, 16
      %v805 = vadd.s32 %v802, 24
      %v806 = vadd.s32 %v802, 32
      %v807 = vadd.s32 %v802, 40
      %v808 = vadd.s32 %v802, 48
      %v809 = vadd.s32 %v802, 56
      %v810 = vadd.s32 %v802, 64
      %v811 = vadd.s32 %v802, 72
      %vm812 = vcmp.lt.s32.totalorder %v802, 0
      %v813 = vsub.s32 0, %v802
      %v814 = vsel %vm812, %v813, %v802
      %v815 = vmul.u32.u64.compose %v814, 3435973837
      %v816 = vextract.low.u32 %v815
      %v817 = vextract.high.u32 %v815
      %v818 = vshrl.u32 %v817, 3
      %v819 = vmul.u32 %v818, 10
      %v820 = vsub.s32 %v814, %v819
      %v821 = vsub.s32 0, %v820
      %v822 = vsel %vm812, %v821, %v820
      %vm823 = vcmp.lt.s32.totalorder %v803, 0
      %v824 = vsub.s32 0, %v803
      %v825 = vsel %vm823, %v824, %v803
      %v826 = vmul.u32.u64.compose %v825, 3435973837
      %v827 = vextract.low.u32 %v826
      %v828 = vextract.high.u32 %v826
      %v829 = vshrl.u32 %v828, 3
      %v830 = vmul.u32 %v829, 10
      %v831 = vsub.s32 %v825, %v830
      %v832 = vsub.s32 0, %v831
      %v833 = vsel %vm823, %v832, %v831
      %vm834 = vcmp.lt.s32.totalorder %v804, 0
      %v835 = vsub.s32 0, %v804
      %v836 = vsel %vm834, %v835, %v804
      %v837 = vmul.u32.u64.compose %v836, 3435973837
      %v838 = vextract.low.u32 %v837
      %v839 = vextract.high.u32 %v837
      %v840 = vshrl.u32 %v839, 3
      %v841 = vmul.u32 %v840, 10
      %v842 = vsub.s32 %v836, %v841
      %v843 = vsub.s32 0, %v842
      %v844 = vsel %vm834, %v843, %v842
      %vm845 = vcmp.lt.s32.totalorder %v805, 0
      %v846 = vsub.s32 0, %v805
      %v847 = vsel %vm845, %v846, %v805
      %v848 = vmul.u32.u64.compose %v847, 3435973837
      %v849 = vextract.low.u32 %v848
      %v850 = vextract.high.u32 %v848
      %v851 = vshrl.u32 %v850, 3
      %v852 = vmul.u32 %v851, 10
      %v853 = vsub.s32 %v847, %v852
      %v854 = vsub.s32 0, %v853
      %v855 = vsel %vm845, %v854, %v853
      %vm856 = vcmp.lt.s32.totalorder %v806, 0
      %v857 = vsub.s32 0, %v806
      %v858 = vsel %vm856, %v857, %v806
      %v859 = vmul.u32.u64.compose %v858, 3435973837
      %v860 = vextract.low.u32 %v859
      %v861 = vextract.high.u32 %v859
      %v862 = vshrl.u32 %v861, 3
      %v863 = vmul.u32 %v862, 10
      %v864 = vsub.s32 %v858, %v863
      %v865 = vsub.s32 0, %v864
      %v866 = vsel %vm856, %v865, %v864
      %vm867 = vcmp.lt.s32.totalorder %v807, 0
      %v868 = vsub.s32 0, %v807
      %v869 = vsel %vm867, %v868, %v807
      %v870 = vmul.u32.u64.compose %v869, 3435973837
      %v871 = vextract.low.u32 %v870
      %v872 = vextract.high.u32 %v870
      %v873 = vshrl.u32 %v872, 3
      %v874 = vmul.u32 %v873, 10
      %v875 = vsub.s32 %v869, %v874
      %v876 = vsub.s32 0, %v875
      %v877 = vsel %vm867, %v876, %v875
      %vm878 = vcmp.lt.s32.totalorder %v808, 0
      %v879 = vsub.s32 0, %v808
      %v880 = vsel %vm878, %v879, %v808
      %v881 = vmul.u32.u64.compose %v880, 3435973837
      %v882 = vextract.low.u32 %v881
      %v883 = vextract.high.u32 %v881
      %v884 = vshrl.u32 %v883, 3
      %v885 = vmul.u32 %v884, 10
      %v886 = vsub.s32 %v880, %v885
      %v887 = vsub.s32 0, %v886
      %v888 = vsel %vm878, %v887, %v886
      %vm889 = vcmp.lt.s32.totalorder %v809, 0
      %v890 = vsub.s32 0, %v809
      %v891 = vsel %vm889, %v890, %v809
      %v892 = vmul.u32.u64.compose %v891, 3435973837
      %v893 = vextract.low.u32 %v892
      %v894 = vextract.high.u32 %v892
      %v895 = vshrl.u32 %v894, 3
      %v896 = vmul.u32 %v895, 10
      %v897 = vsub.s32 %v891, %v896
      %v898 = vsub.s32 0, %v897
      %v899 = vsel %vm889, %v898, %v897
      %vm900 = vcmp.lt.s32.totalorder %v810, 0
      %v901 = vsub.s32 0, %v810
      %v902 = vsel %vm900, %v901, %v810
      %v903 = vmul.u32.u64.compose %v902, 3435973837
      %v904 = vextract.low.u32 %v903
      %v905 = vextract.high.u32 %v903
      %v906 = vshrl.u32 %v905, 3
      %v907 = vmul.u32 %v906, 10
      %v908 = vsub.s32 %v902, %v907
      %v909 = vsub.s32 0, %v908
      %v910 = vsel %vm900, %v909, %v908
      %vm911 = vcmp.lt.s32.totalorder %v811, 0
      %v912 = vsub.s32 0, %v811
      %v913 = vsel %vm911, %v912, %v811
      %v914 = vmul.u32.u64.compose %v913, 3435973837
      %v915 = vextract.low.u32 %v914
      %v916 = vextract.high.u32 %v914
      %v917 = vshrl.u32 %v916, 3
      %v918 = vmul.u32 %v917, 10
      %v919 = vsub.s32 %v913, %v918
      %v920 = vsub.s32 0, %v919
      %v921 = vsel %vm911, %v920, %v919
      %vm922 = vcmp.ne.s32.totalorder %v822, 0
      %vm923 = vcmp.ne.s32.totalorder %v833, 0
      %vm924 = vcmp.ne.s32.totalorder %v844, 0
      %vm925 = vcmp.ne.s32.totalorder %v855, 0
      %vm926 = vcmp.ne.s32.totalorder %v866, 0
      %vm927 = vcmp.ne.s32.totalorder %v877, 0
      %vm928 = vcmp.ne.s32.totalorder %v888, 0
      %vm929 = vcmp.ne.s32.totalorder %v899, 0
      %vm930 = vcmp.ne.s32.totalorder %v910, 0
      %vm931 = vcmp.ne.s32.totalorder %v921, 0
      %vm932 = vcmp.lt.s32.totalorder %v822, 0
      %vm933 = vcmp.lt.s32.totalorder %v833, 0
      %vm934 = vcmp.lt.s32.totalorder %v844, 0
      %vm935 = vcmp.lt.s32.totalorder %v855, 0
      %vm936 = vcmp.lt.s32.totalorder %v866, 0
      %vm937 = vcmp.lt.s32.totalorder %v877, 0
      %vm938 = vcmp.lt.s32.totalorder %v888, 0
      %vm939 = vcmp.lt.s32.totalorder %v899, 0
      %vm940 = vcmp.lt.s32.totalorder %v910, 0
      %vm941 = vcmp.lt.s32.totalorder %v921, 0
      %vm942 = vmand %vm932, %vm922
      %vm943 = vmand %vm933, %vm923
      %vm944 = vmand %vm934, %vm924
      %vm945 = vmand %vm935, %vm925
      %vm946 = vmand %vm936, %vm926
      %vm947 = vmand %vm937, %vm927
      %vm948 = vmand %vm938, %vm928
      %vm949 = vmand %vm939, %vm929
      %vm950 = vmand %vm940, %vm930
      %vm951 = vmand %vm941, %vm931
      %v952 = vadd.s32 %v822, 10
      %v953 = vadd.s32 %v833, 10
      %v954 = vadd.s32 %v844, 10
      %v955 = vadd.s32 %v855, 10
      %v956 = vadd.s32 %v866, 10
      %v957 = vadd.s32 %v877, 10
      %v958 = vadd.s32 %v888, 10
      %v959 = vadd.s32 %v899, 10
      %v960 = vadd.s32 %v910, 10
      %v961 = vadd.s32 %v921, 10
      %v962 = vsel %vm942, %v952, %v822
      %v963 = vsel %vm943, %v953, %v833
      %v964 = vsel %vm944, %v954, %v844
      %v965 = vsel %vm945, %v955, %v855
      %v966 = vsel %vm946, %v956, %v866
      %v967 = vsel %vm947, %v957, %v877
      %v968 = vsel %vm948, %v958, %v888
      %v969 = vsel %vm949, %v959, %v899
      %v970 = vsel %vm950, %v960, %v910
      %v971 = vsel %vm951, %v961, %v921
      %vm972 = vcmp.lt.s32.totalorder %v962, 8
      %vm973 = vcmp.lt.s32.totalorder %v963, 8
      %vm974 = vcmp.lt.s32.totalorder %v964, 8
      %vm975 = vcmp.lt.s32.totalorder %v965, 8
      %vm976 = vcmp.lt.s32.totalorder %v966, 8
      %vm977 = vcmp.lt.s32.totalorder %v967, 8
      %vm978 = vcmp.lt.s32.totalorder %v968, 8
      %vm979 = vcmp.lt.s32.totalorder %v969, 8
      %vm980 = vcmp.lt.s32.totalorder %v970, 8
      %vm981 = vcmp.lt.s32.totalorder %v971, 8
      %v982 = vsel %vm972, 1, 0
      %v983 = vsel %vm973, 1, 0
      %v984 = vsel %vm974, 1, 0
      %v985 = vsel %vm975, 1, 0
      %v986 = vsel %vm976, 1, 0
      %v987 = vsel %vm977, 1, 0
      %v988 = vsel %vm978, 1, 0
      %v989 = vsel %vm979, 1, 0
      %v990 = vsel %vm980, 1, 0
      %v991 = vsel %vm981, 1, 0
      %vm992 = vcmp.eq.s32.totalorder %v982, 1
      %vm993 = vcmp.eq.s32.totalorder %v983, 1
      %vm994 = vcmp.eq.s32.totalorder %v984, 1
      %vm995 = vcmp.eq.s32.totalorder %v985, 1
      %vm996 = vcmp.eq.s32.totalorder %v986, 1
      %vm997 = vcmp.eq.s32.totalorder %v987, 1
      %vm998 = vcmp.eq.s32.totalorder %v988, 1
      %vm999 = vcmp.eq.s32.totalorder %v989, 1
      %vm1000 = vcmp.eq.s32.totalorder %v990, 1
      %vm1001 = vcmp.eq.s32.totalorder %v991, 1
      %v1002 = vsel %vm992, %v791, 0.0
      %v1003 = vsel %vm993, %v792, 0.0
      %v1004 = vsel %vm994, %v793, 0.0
      %v1005 = vsel %vm995, %v794, 0.0
      %v1006 = vsel %vm996, %v795, 0.0
      %v1007 = vsel %vm997, %v796, 0.0
      %v1008 = vsel %vm998, %v797, 0.0
      %v1009 = vsel %vm999, %v798, 0.0
      %v1010 = vsel %vm1000, %v799, 0.0
      %v1011 = vsel %vm1001, %v800, 0.0
      %1012 = vst [vmem:[#allocation2] sm:$0xff] 0
      %1013 = vst [vmem:[#allocation2 + $0x30] sm:$0xff] 0
      %v1014 = vpack.c.bf16 %v1003, %v1002
      %v1015 = vpack.c.bf16 %v1005, %v1004
      %v1016 = vpack.c.bf16 %v1007, %v1006
      %v1017 = vpack.c.bf16 %v1009, %v1008
      %v1018 = vpack.c.bf16 %v1011, %v1010
      %1019 = vst [vmem:[#allocation2 + $0x8] sm:$0xff] %v1014
      %1020 = vst [vmem:[#allocation2 + $0x10] sm:$0xff] %v1015
      %1021 = vst [vmem:[#allocation2 + $0x18] sm:$0xff] %v1016
      %1022 = vst [vmem:[#allocation2 + $0x20] sm:$0xff] %v1017
      %1023 = vst [vmem:[#allocation2 + $0x28] sm:$0xff] %v1018
      %v1024 = vld [vmem:[#allocation2] sm:$0xfc]
      %v1025 = vld [vmem:[#allocation2 + $0x8] sm:$0xff]
      %v1026 = vld [vmem:[#allocation2 + $0x10] sm:$0xff]
      %v1027 = vld [vmem:[#allocation2 + $0x18] sm:$0xff]
      %v1028 = vld [vmem:[#allocation2 + $0x20] sm:$0xff]
      %v1029 = vld [vmem:[#allocation2 + $0x28] sm:$0x7]
      %v1030 = vld [vmem:[#allocation2] sm:$0xf8]
      %v1031 = vld [vmem:[#allocation2 + $0x28] sm:$0xf]
      %v1032 = vld [vmem:[#allocation2] sm:$0x80]
      %v1033 = vld [vmem:[#allocation2 + $0x28] sm:$0xff]
      %v1034 = vld [vmem:[#allocation2 + $0x8] sm:$0xff]
      %v1035 = vld [vmem:[#allocation2 + $0x10] sm:$0xff]
      %v1036 = vld [vmem:[#allocation2 + $0x18] sm:$0xff]
      %v1037 = vld [vmem:[#allocation2 + $0x20] sm:$0xff]
      %v1038 = vld [vmem:[#allocation2 + $0x28] sm:$0xff]
      %v1039 = vld [vmem:[#allocation2 + $0x30] sm:$0x1]
      %v1040 = vld [vmem:[#allocation2 + $0x8] sm:$0xf0]
      %v1041 = vld [vmem:[#allocation2 + $0x30] sm:$0x1f]
      %v1042 = vld [vmem:[#allocation2 + $0x8] sm:$0xe0]
      %v1043 = vld [vmem:[#allocation2 + $0x30] sm:$0x3f]
      %v1045 = vshrl.u32 %v1030, 16
      %v1047 = vshll.u32 %v1030, 16
      %v1049 = vrot.slane %v1047, 1
      %v1050 = vor.u32 %v1045, %v1049
      %v1052 = vshll.u32 %v1025, 16
      %v1054 = vrot.slane %v1052, 1
      %v1055 = vsel %vm276, %v1050, %v1054
      %v1056 = vshrl.u32 %v1025, 16
      %v1058 = vor.u32 %v1056, %v1054
      %v1060 = vshll.u32 %v1026, 16
      %v1062 = vrot.slane %v1060, 1
      %v1063 = vsel %vm276, %v1058, %v1062
      %v1064 = vshrl.u32 %v1026, 16
      %v1066 = vor.u32 %v1064, %v1062
      %v1068 = vshll.u32 %v1027, 16
      %v1070 = vrot.slane %v1068, 1
      %v1071 = vsel %vm276, %v1066, %v1070
      %v1072 = vshrl.u32 %v1027, 16
      %v1074 = vor.u32 %v1072, %v1070
      %v1076 = vshll.u32 %v1028, 16
      %v1078 = vrot.slane %v1076, 1
      %v1079 = vsel %vm276, %v1074, %v1078
      %v1080 = vshrl.u32 %v1028, 16
      %v1082 = vor.u32 %v1080, %v1078
      %v1084 = vshll.u32 %v1029, 16
      %v1086 = vrot.slane %v1084, 1
      %v1087 = vsel %vm276, %v1082, %v1086
      %v1088 = vshrl.u32 %v1029, 16
      %v1090 = vor.u32 %v1088, %v1086
      %v1097 = vrot.slane %v1030, 1
      %v1098 = vrot.slane %v1025, 1
      %v1099 = vsel %vm334, %v1097, %v1098
      %v1100 = vrot.slane %v1026, 1
      %v1101 = vsel %vm334, %v1098, %v1100
      %v1102 = vrot.slane %v1027, 1
      %v1103 = vsel %vm334, %v1100, %v1102
      %v1104 = vrot.slane %v1028, 1
      %v1105 = vsel %vm334, %v1102, %v1104
      %v1106 = vrot.slane %v1031, 1
      %v1107 = vsel %vm334, %v1104, %v1106
      %vm1110 = vcmask 1042432
      %v1111 = vrot.slane %v1032, 5
      %v1112 = vrot.slane %v1025, 5
      %v1113 = vsel %vm1110, %v1111, %v1112
      %v1114 = vrot.slane %v1026, 5
      %v1115 = vsel %vm1110, %v1112, %v1114
      %v1116 = vrot.slane %v1027, 5
      %v1117 = vsel %vm1110, %v1114, %v1116
      %v1118 = vrot.slane %v1028, 5
      %v1119 = vsel %vm1110, %v1116, %v1118
      %v1120 = vrot.slane %v1033, 5
      %v1121 = vsel %vm1110, %v1118, %v1120
      %vm1122 = vsmask.f32 2304
      %v1123 = vrot.slane %v1056, 5
      %v1124 = vrot.slane %v1052, 6
      %v1125 = vor.u32 %v1123, %v1124
      %v1126 = vrot.slane %v1064, 5
      %v1127 = vrot.slane %v1060, 6
      %v1128 = vor.u32 %v1126, %v1127
      %v1129 = vsel %vm1122, %v1125, %v1128
      %v1130 = vrot.slane %v1072, 5
      %v1131 = vrot.slane %v1068, 6
      %v1132 = vor.u32 %v1130, %v1131
      %v1133 = vsel %vm1122, %v1128, %v1132
      %v1134 = vrot.slane %v1080, 5
      %v1135 = vrot.slane %v1076, 6
      %v1136 = vor.u32 %v1134, %v1135
      %v1137 = vsel %vm1122, %v1132, %v1136
      %v1139 = vshrl.u32 %v1033, 16
      %v1141 = vrot.slane %v1139, 5
      %v1142 = vshll.u32 %v1033, 16
      %v1144 = vrot.slane %v1142, 6
      %v1145 = vor.u32 %v1141, %v1144
      %v1146 = vsel %vm1122, %v1136, %v1145
      %vm1153 = vcmask 1041408
      %v1154 = vrot.slane %v1034, 6
      %v1155 = vrot.slane %v1035, 6
      %v1156 = vsel %vm1153, %v1154, %v1155
      %v1157 = vrot.slane %v1036, 6
      %v1158 = vsel %vm1153, %v1155, %v1157
      %v1159 = vrot.slane %v1037, 6
      %v1160 = vsel %vm1153, %v1157, %v1159
      %v1161 = vrot.slane %v1038, 6
      %v1162 = vsel %vm1153, %v1159, %v1161
      %v1163 = vrot.slane %v1039, 6
      %v1164 = vsel %vm1153, %v1161, %v1163
      %v1167 = vrot.slane %v1040, 2
      %v1168 = vrot.slane %v1035, 2
      %v1169 = vsel %vm459, %v1167, %v1168
      %v1170 = vrot.slane %v1036, 2
      %v1171 = vsel %vm459, %v1168, %v1170
      %v1172 = vrot.slane %v1037, 2
      %v1173 = vsel %vm459, %v1170, %v1172
      %v1174 = vrot.slane %v1038, 2
      %v1175 = vsel %vm459, %v1172, %v1174
      %v1176 = vrot.slane %v1041, 2
      %v1177 = vsel %vm459, %v1174, %v1176
      %v1179 = vshrl.u32 %v1042, 16
      %v1181 = vrot.slane %v1179, 2
      %v1182 = vshll.u32 %v1042, 16
      %v1184 = vrot.slane %v1182, 3
      %v1185 = vor.u32 %v1181, %v1184
      %v1187 = vshrl.u32 %v1035, 16
      %v1189 = vrot.slane %v1187, 2
      %v1190 = vshll.u32 %v1035, 16
      %v1192 = vrot.slane %v1190, 3
      %v1193 = vor.u32 %v1189, %v1192
      %v1194 = vsel %vm514, %v1185, %v1193
      %v1196 = vshrl.u32 %v1036, 16
      %v1198 = vrot.slane %v1196, 2
      %v1199 = vshll.u32 %v1036, 16
      %v1201 = vrot.slane %v1199, 3
      %v1202 = vor.u32 %v1198, %v1201
      %v1203 = vsel %vm514, %v1193, %v1202
      %v1205 = vshrl.u32 %v1037, 16
      %v1207 = vrot.slane %v1205, 2
      %v1208 = vshll.u32 %v1037, 16
      %v1210 = vrot.slane %v1208, 3
      %v1211 = vor.u32 %v1207, %v1210
      %v1212 = vsel %vm514, %v1202, %v1211
      %v1214 = vshrl.u32 %v1038, 16
      %v1216 = vrot.slane %v1214, 2
      %v1217 = vshll.u32 %v1038, 16
      %v1219 = vrot.slane %v1217, 3
      %v1220 = vor.u32 %v1216, %v1219
      %v1221 = vsel %vm514, %v1211, %v1220
      %v1223 = vshrl.u32 %v1041, 16
      %v1225 = vrot.slane %v1223, 2
      %v1226 = vshll.u32 %v1041, 16
      %v1228 = vrot.slane %v1226, 3
      %v1229 = vor.u32 %v1225, %v1228
      %v1230 = vsel %vm514, %v1220, %v1229
      %v1233 = vrot.slane %v1042, 3
      %v1234 = vrot.slane %v1035, 3
      %v1235 = vsel %vm566, %v1233, %v1234
      %v1236 = vrot.slane %v1036, 3
      %v1237 = vsel %vm566, %v1234, %v1236
      %v1238 = vrot.slane %v1037, 3
      %v1239 = vsel %vm566, %v1236, %v1238
      %v1240 = vrot.slane %v1038, 3
      %v1241 = vsel %vm566, %v1238, %v1240
      %v1242 = vrot.slane %v1043, 3
      %v1243 = vsel %vm566, %v1240, %v1242
      %v1244 = vld [vmem:[%s3] sm:$0xf]
      %v1245 = vld [vmem:[%s3 + $0x4] sm:$0xf]
      %v1246 = vld [vmem:[%s3 + $0x8] sm:$0xf]
      %v1247 = vld [vmem:[%s3 + $0xc] sm:$0xf]
      %v1248 = vld [vmem:[%s3 + $0x10] sm:$0xf]
      %v1249 = vld [vmem:[%s3 + $0x14] sm:$0xf]
      %v1250 = vld [vmem:[%s3 + $0x18] sm:$0xf]
      %v1251 = vld [vmem:[%s3 + $0x1c] sm:$0xf]
      %v1252 = vld [vmem:[%s3 + $0x20] sm:$0xf]
      %v1253 = vld [vmem:[%s3 + $0x24] sm:$0xf]
      %v1254 = vld [vmem:[%s3 + $0x28] sm:$0xf]
      %v1255 = vld [vmem:[%s3 + $0x2c] sm:$0xf]
      %v1256 = vld [vmem:[%s3 + $0x30] sm:$0xf]
      %v1257 = vld [vmem:[%s3 + $0x34] sm:$0xf]
      %v1258 = vld [vmem:[%s3 + $0x38] sm:$0xf]
      %v1259 = vld [vmem:[%s3 + $0x3c] sm:$0xf]
      %v1260 = vld [vmem:[%s3 + $0x40] sm:$0xf]
      %v1261 = vld [vmem:[%s3 + $0x44] sm:$0xf]
      %v1262 = vld [vmem:[%s3 + $0x48] sm:$0xf]
      %v1263 = vld [vmem:[%s3 + $0x4c] sm:$0xf]
      %v1264 = vld [vmem:[%s3 + $0x50] sm:$0xf]
      %v1265 = vld [vmem:[%s3 + $0x54] sm:$0xf]
      %v1266 = vld [vmem:[%s3 + $0x58] sm:$0xf]
      %v1267 = vld [vmem:[%s3 + $0x5c] sm:$0xf]
      %v1268 = vld [vmem:[%s3 + $0x60] sm:$0xf]
      %v1269 = vld [vmem:[%s3 + $0x64] sm:$0xf]
      %v1270 = vld [vmem:[%s3 + $0x68] sm:$0xf]
      %v1271 = vld [vmem:[%s3 + $0x6c] sm:$0xf]
      %v1272 = vld [vmem:[%s3 + $0x70] sm:$0xf]
      %v1273 = vld [vmem:[%s3 + $0x74] sm:$0xf]
      %v1274 = vld [vmem:[%s3 + $0x78] sm:$0xf]
      %v1275 = vld [vmem:[%s3 + $0x7c] sm:$0xf]
      %v1276 = vld [vmem:[%s3 + $0x80] sm:$0xf]
      %v1277 = vld [vmem:[%s3 + $0x84] sm:$0xf]
      %v1278 = vld [vmem:[%s3 + $0x88] sm:$0xf]
      %v1279 = vld [vmem:[%s3 + $0x8c] sm:$0xf]
      %v1280 = vld [vmem:[%s3 + $0x90] sm:$0xf]
      %v1281 = vld [vmem:[%s3 + $0x94] sm:$0xf]
      %v1282 = vld [vmem:[%s3 + $0x98] sm:$0xf]
      %v1283 = vld [vmem:[%s3 + $0x9c] sm:$0xf]
      %v1284 = vld [vmem:[%s3 + $0xa0] sm:$0xf]
      %v1285 = vld [vmem:[%s3 + $0xa4] sm:$0xf]
      %v1286 = vld [vmem:[%s3 + $0xa8] sm:$0xf]
      %v1287 = vld [vmem:[%s3 + $0xac] sm:$0xf]
      %v1288 = vld [vmem:[%s3 + $0xb0] sm:$0xf]
      %v1289 = vld [vmem:[%s3 + $0xb4] sm:$0xf]
      %v1290 = vld [vmem:[%s3 + $0xb8] sm:$0xf]
      %v1291 = vld [vmem:[%s3 + $0xbc] sm:$0xf]
      %v1292 = vld [vmem:[%s3 + $0xc0] sm:$0xf]
      %v1293 = vld [vmem:[%s3 + $0xc4] sm:$0xf]
      %v1294 = vld [vmem:[%s3 + $0xc8] sm:$0xf]
      %v1295 = vld [vmem:[%s3 + $0xcc] sm:$0xf]
      %v1296 = vld [vmem:[%s3 + $0xd0] sm:$0xf]
      %v1297 = vld [vmem:[%s3 + $0xd4] sm:$0xf]
      %v1298 = vld [vmem:[%s3 + $0xd8] sm:$0xf]
      %v1299 = vld [vmem:[%s3 + $0xdc] sm:$0xf]
      %v1300 = vld [vmem:[%s3 + $0xe0] sm:$0xf]
      %v1301 = vld [vmem:[%s3 + $0xe4] sm:$0xf]
      %v1302 = vld [vmem:[%s3 + $0xe8] sm:$0xf]
      %v1303 = vld [vmem:[%s3 + $0xec] sm:$0xf]
      %v1304 = vld [vmem:[%s3 + $0xf0] sm:$0xf]
      %v1305 = vld [vmem:[%s3 + $0xf4] sm:$0xf]
      %v1306 = vld [vmem:[%s3 + $0xf8] sm:$0xf]
      %v1307 = vld [vmem:[%s3 + $0xfc] sm:$0xf]
      %v1308 = vld [vmem:[%s3 + $0x100] sm:$0xf]
      %v1309 = vld [vmem:[%s3 + $0x104] sm:$0xf]
      %v1310 = vld [vmem:[%s3 + $0x108] sm:$0xf]
      %v1311 = vld [vmem:[%s3 + $0x10c] sm:$0xf]
      %v1312 = vld [vmem:[%s3 + $0x110] sm:$0xf]
      %v1313 = vld [vmem:[%s3 + $0x114] sm:$0xf]
      %v1314 = vld [vmem:[%s3 + $0x118] sm:$0xf]
      %v1315 = vld [vmem:[%s3 + $0x11c] sm:$0xf]
      %v1316 = vld [vmem:[%s3 + $0x120] sm:$0xf]
      %v1317 = vld [vmem:[%s3 + $0x124] sm:$0xf]
      %v1318 = vld [vmem:[%s3 + $0x128] sm:$0xf]
      %v1319 = vld [vmem:[%s3 + $0x12c] sm:$0xf]
      %v1320 = vld [vmem:[%s3 + $0x130] sm:$0xf]
      %v1321 = vld [vmem:[%s3 + $0x134] sm:$0xf]
      %v1322 = vld [vmem:[%s3 + $0x138] sm:$0xf]
      %v1323 = vld [vmem:[%s3 + $0x13c] sm:$0xf]
      %v1324 = vld [vmem:[%s3 + $0x140] sm:$0xf]
      %v1325 = vld [vmem:[%s3 + $0x144] sm:$0xf]
      %v1326 = vld [vmem:[%s3 + $0x148] sm:$0xf]
      %v1327 = vld [vmem:[%s3 + $0x14c] sm:$0xf]
      %v1328 = vld [vmem:[%s3 + $0x150] sm:$0xf]
      %v1329 = vld [vmem:[%s3 + $0x154] sm:$0xf]
      %v1330 = vld [vmem:[%s3 + $0x158] sm:$0xf]
      %v1331 = vld [vmem:[%s3 + $0x15c] sm:$0xf]
      %v1332 = vld [vmem:[%s3 + $0x160] sm:$0xf]
      %v1333 = vld [vmem:[%s3 + $0x164] sm:$0xf]
      %v1334 = vld [vmem:[%s3 + $0x168] sm:$0xf]
      %v1335 = vld [vmem:[%s3 + $0x16c] sm:$0xf]
      %v1336 = vld [vmem:[%s3 + $0x170] sm:$0xf]
      %v1337 = vld [vmem:[%s3 + $0x174] sm:$0xf]
      %v1338 = vld [vmem:[%s3 + $0x178] sm:$0xf]
      %v1339 = vld [vmem:[%s3 + $0x17c] sm:$0xf]
      %v1340 = vld [vmem:[%s3 + $0x180] sm:$0xf]
      %v1341 = vld [vmem:[%s3 + $0x184] sm:$0xf]
      %v1342 = vld [vmem:[%s3 + $0x188] sm:$0xf]
      %v1343 = vld [vmem:[%s3 + $0x18c] sm:$0xf]
      %v1344 = vld [vmem:[%s3 + $0x190] sm:$0xf]
      %v1345 = vld [vmem:[%s3 + $0x194] sm:$0xf]
      %v1346 = vld [vmem:[%s3 + $0x198] sm:$0xf]
      %v1347 = vld [vmem:[%s3 + $0x19c] sm:$0xf]
      %v1348 = vld [vmem:[%s3 + $0x1a0] sm:$0xf]
      %v1349 = vld [vmem:[%s3 + $0x1a4] sm:$0xf]
      %v1350 = vld [vmem:[%s3 + $0x1a8] sm:$0xf]
      %v1351 = vld [vmem:[%s3 + $0x1ac] sm:$0xf]
      %v1352 = vld [vmem:[%s3 + $0x1b0] sm:$0xf]
      %v1353 = vld [vmem:[%s3 + $0x1b4] sm:$0xf]
      %v1354 = vld [vmem:[%s3 + $0x1b8] sm:$0xf]
      %v1355 = vld [vmem:[%s3 + $0x1bc] sm:$0xf]
      %v1356 = vld [vmem:[%s3 + $0x1c0] sm:$0xf]
      %v1357 = vld [vmem:[%s3 + $0x1c4] sm:$0xf]
      %v1358 = vld [vmem:[%s3 + $0x1c8] sm:$0xf]
      %v1359 = vld [vmem:[%s3 + $0x1cc] sm:$0xf]
      %v1360 = vld [vmem:[%s3 + $0x1d0] sm:$0xf]
      %v1361 = vld [vmem:[%s3 + $0x1d4] sm:$0xf]
      %v1362 = vld [vmem:[%s3 + $0x1d8] sm:$0xf]
      %v1363 = vld [vmem:[%s3 + $0x1dc] sm:$0xf]
      %v1364 = vld [vmem:[%s3 + $0x1e0] sm:$0xf]
      %v1365 = vld [vmem:[%s3 + $0x1e4] sm:$0xf]
      %v1366 = vld [vmem:[%s3 + $0x1e8] sm:$0xf]
      %v1367 = vld [vmem:[%s3 + $0x1ec] sm:$0xf]
      %v1368 = vld [vmem:[%s3 + $0x1f0] sm:$0xf]
      %v1369 = vld [vmem:[%s3 + $0x1f4] sm:$0xf]
      %v1370 = vld [vmem:[%s3 + $0x1f8] sm:$0xf]
      %v1371 = vld [vmem:[%s3 + $0x1fc] sm:$0xf]
      %v1372 = vld [vmem:[%s3 + $0x200] sm:$0xf]
      %v1373 = vld [vmem:[%s3 + $0x204] sm:$0xf]
      %v1374 = vld [vmem:[%s3 + $0x208] sm:$0xf]
      %v1375 = vld [vmem:[%s3 + $0x20c] sm:$0xf]
      %v1376 = vld [vmem:[%s3 + $0x210] sm:$0xf]
      %v1377 = vld [vmem:[%s3 + $0x214] sm:$0xf]
      %v1378 = vld [vmem:[%s3 + $0x218] sm:$0xf]
      %v1379 = vld [vmem:[%s3 + $0x21c] sm:$0xf]
      %v1380 = vld [vmem:[%s3 + $0x220] sm:$0xf]
      %v1381 = vld [vmem:[%s3 + $0x224] sm:$0xf]
      %v1382 = vld [vmem:[%s3 + $0x228] sm:$0xf]
      %v1383 = vld [vmem:[%s3 + $0x22c] sm:$0xf]
      %v1384 = vld [vmem:[%s3 + $0x230] sm:$0xf]
      %v1385 = vld [vmem:[%s3 + $0x234] sm:$0xf]
      %v1386 = vld [vmem:[%s3 + $0x238] sm:$0xf]
      %v1387 = vld [vmem:[%s3 + $0x23c] sm:$0xf]
      %v1388 = vld [vmem:[%s4] sm:$0x1]
      %v1390 = vlaneseq
      %v1391 = vshrl.u32 %v1390, 7
      %v1392 = vsub.s32 0, %v1391
      %v1393 = vrot.slane %v1388, %v1392
      %v1396 = vshrl.u32 %v1024, 16
      %v1398 = vrot.slane %v1396, 2
      %v1399 = vshll.u32 %v1024, 16
      %v1401 = vrot.slane %v1399, 3
      %v1402 = vor.u32 %v1398, %v1401
      %v1403 = vrot.slane %v1056, 2
      %v1404 = vrot.slane %v1052, 3
      %v1405 = vor.u32 %v1403, %v1404
      %v1406 = vsel %vm514, %v1402, %v1405
      %v1408 = vshrl.u32 %v1055, 16
      %v1410 = vrot.slane %v1408, 2
      %v1411 = vshll.u32 %v1055, 16
      %v1413 = vrot.slane %v1411, 3
      %v1414 = vor.u32 %v1410, %v1413
      %v1416 = vshrl.u32 %v1063, 16
      %v1418 = vrot.slane %v1416, 2
      %v1419 = vshll.u32 %v1063, 16
      %v1421 = vrot.slane %v1419, 3
      %v1422 = vor.u32 %v1418, %v1421
      %v1423 = vsel %vm514, %v1414, %v1422
      %v1425 = vshrl.u32 %v1099, 16
      %v1427 = vrot.slane %v1425, 2
      %v1428 = vshll.u32 %v1099, 16
      %v1430 = vrot.slane %v1428, 3
      %v1431 = vor.u32 %v1427, %v1430
      %v1433 = vshrl.u32 %v1101, 16
      %v1435 = vrot.slane %v1433, 2
      %v1436 = vshll.u32 %v1101, 16
      %v1438 = vrot.slane %v1436, 3
      %v1439 = vor.u32 %v1435, %v1438
      %v1440 = vsel %vm514, %v1431, %v1439
      %v1442 = vshrl.u32 %v1113, 16
      %v1444 = vrot.slane %v1442, 2
      %v1445 = vshll.u32 %v1113, 16
      %v1447 = vrot.slane %v1445, 3
      %v1448 = vor.u32 %v1444, %v1447
      %v1450 = vshrl.u32 %v1115, 16
      %v1452 = vrot.slane %v1450, 2
      %v1453 = vshll.u32 %v1115, 16
      %v1455 = vrot.slane %v1453, 3
      %v1456 = vor.u32 %v1452, %v1455
      %v1457 = vsel %vm514, %v1448, %v1456
      %v1459 = vshrl.u32 %v1125, 16
      %v1461 = vrot.slane %v1459, 2
      %v1462 = vshll.u32 %v1125, 16
      %v1464 = vrot.slane %v1462, 3
      %v1465 = vor.u32 %v1461, %v1464
      %v1467 = vshrl.u32 %v1129, 16
      %v1469 = vrot.slane %v1467, 2
      %v1470 = vshll.u32 %v1129, 16
      %v1472 = vrot.slane %v1470, 3
      %v1473 = vor.u32 %v1469, %v1472
      %v1474 = vsel %vm514, %v1465, %v1473
      %v1476 = vshrl.u32 %v1154, 16
      %v1478 = vrot.slane %v1476, 2
      %v1479 = vshll.u32 %v1154, 16
      %v1481 = vrot.slane %v1479, 3
      %v1482 = vor.u32 %v1478, %v1481
      %v1484 = vshrl.u32 %v1156, 16
      %v1486 = vrot.slane %v1484, 2
      %v1487 = vshll.u32 %v1156, 16
      %v1489 = vrot.slane %v1487, 3
      %v1490 = vor.u32 %v1486, %v1489
      %v1491 = vsel %vm514, %v1482, %v1490
      %v1493 = vshrl.u32 %v1169, 16
      %v1495 = vrot.slane %v1493, 2
      %v1496 = vshll.u32 %v1169, 16
      %v1498 = vrot.slane %v1496, 3
      %v1499 = vor.u32 %v1495, %v1498
      %v1501 = vshrl.u32 %v1171, 16
      %v1503 = vrot.slane %v1501, 2
      %v1504 = vshll.u32 %v1171, 16
      %v1506 = vrot.slane %v1504, 3
      %v1507 = vor.u32 %v1503, %v1506
      %v1508 = vsel %vm514, %v1499, %v1507
      %v1510 = vshrl.u32 %v1194, 16
      %v1512 = vrot.slane %v1510, 2
      %v1513 = vshll.u32 %v1194, 16
      %v1515 = vrot.slane %v1513, 3
      %v1516 = vor.u32 %v1512, %v1515
      %v1518 = vshrl.u32 %v1203, 16
      %v1520 = vrot.slane %v1518, 2
      %v1521 = vshll.u32 %v1203, 16
      %v1523 = vrot.slane %v1521, 3
      %v1524 = vor.u32 %v1520, %v1523
      %v1525 = vsel %vm514, %v1516, %v1524
      %v1527 = vshrl.u32 %v1235, 16
      %v1529 = vrot.slane %v1527, 2
      %v1530 = vshll.u32 %v1235, 16
      %v1532 = vrot.slane %v1530, 3
      %v1533 = vor.u32 %v1529, %v1532
      %v1535 = vshrl.u32 %v1237, 16
      %v1537 = vrot.slane %v1535, 2
      %v1538 = vshll.u32 %v1237, 16
      %v1540 = vrot.slane %v1538, 3
      %v1541 = vor.u32 %v1537, %v1540
      %v1542 = vsel %vm514, %v1533, %v1541
      %v1543 = vrot.slane %v1064, 2
      %v1544 = vrot.slane %v1060, 3
      %v1545 = vor.u32 %v1543, %v1544
      %v1546 = vsel %vm514, %v1405, %v1545
      %v1548 = vshrl.u32 %v1071, 16
      %v1550 = vrot.slane %v1548, 2
      %v1551 = vshll.u32 %v1071, 16
      %v1553 = vrot.slane %v1551, 3
      %v1554 = vor.u32 %v1550, %v1553
      %v1555 = vsel %vm514, %v1422, %v1554
      %v1557 = vshrl.u32 %v1103, 16
      %v1559 = vrot.slane %v1557, 2
      %v1560 = vshll.u32 %v1103, 16
      %v1562 = vrot.slane %v1560, 3
      %v1563 = vor.u32 %v1559, %v1562
      %v1564 = vsel %vm514, %v1439, %v1563
      %v1566 = vshrl.u32 %v1117, 16
      %v1568 = vrot.slane %v1566, 2
      %v1569 = vshll.u32 %v1117, 16
      %v1571 = vrot.slane %v1569, 3
      %v1572 = vor.u32 %v1568, %v1571
      %v1573 = vsel %vm514, %v1456, %v1572
      %v1575 = vshrl.u32 %v1133, 16
      %v1577 = vrot.slane %v1575, 2
      %v1578 = vshll.u32 %v1133, 16
      %v1580 = vrot.slane %v1578, 3
      %v1581 = vor.u32 %v1577, %v1580
      %v1582 = vsel %vm514, %v1473, %v1581
      %v1584 = vshrl.u32 %v1158, 16
      %v1586 = vrot.slane %v1584, 2
      %v1587 = vshll.u32 %v1158, 16
      %v1589 = vrot.slane %v1587, 3
      %v1590 = vor.u32 %v1586, %v1589
      %v1591 = vsel %vm514, %v1490, %v1590
      %v1593 = vshrl.u32 %v1173, 16
      %v1595 = vrot.slane %v1593, 2
      %v1596 = vshll.u32 %v1173, 16
      %v1598 = vrot.slane %v1596, 3
      %v1599 = vor.u32 %v1595, %v1598
      %v1600 = vsel %vm514, %v1507, %v1599
      %v1602 = vshrl.u32 %v1212, 16
      %v1604 = vrot.slane %v1602, 2
      %v1605 = vshll.u32 %v1212, 16
      %v1607 = vrot.slane %v1605, 3
      %v1608 = vor.u32 %v1604, %v1607
      %v1609 = vsel %vm514, %v1524, %v1608
      %v1611 = vshrl.u32 %v1239, 16
      %v1613 = vrot.slane %v1611, 2
      %v1614 = vshll.u32 %v1239, 16
      %v1616 = vrot.slane %v1614, 3
      %v1617 = vor.u32 %v1613, %v1616
      %v1618 = vsel %vm514, %v1541, %v1617
      %v1619 = vrot.slane %v1072, 2
      %v1620 = vrot.slane %v1068, 3
      %v1621 = vor.u32 %v1619, %v1620
      %v1622 = vsel %vm514, %v1545, %v1621
      %v1624 = vshrl.u32 %v1079, 16
      %v1626 = vrot.slane %v1624, 2
      %v1627 = vshll.u32 %v1079, 16
      %v1629 = vrot.slane %v1627, 3
      %v1630 = vor.u32 %v1626, %v1629
      %v1631 = vsel %vm514, %v1554, %v1630
      %v1633 = vshrl.u32 %v1105, 16
      %v1635 = vrot.slane %v1633, 2
      %v1636 = vshll.u32 %v1105, 16
      %v1638 = vrot.slane %v1636, 3
      %v1639 = vor.u32 %v1635, %v1638
      %v1640 = vsel %vm514, %v1563, %v1639
      %v1642 = vshrl.u32 %v1119, 16
      %v1644 = vrot.slane %v1642, 2
      %v1645 = vshll.u32 %v1119, 16
      %v1647 = vrot.slane %v1645, 3
      %v1648 = vor.u32 %v1644, %v1647
      %v1649 = vsel %vm514, %v1572, %v1648
      %v1651 = vshrl.u32 %v1137, 16
      %v1653 = vrot.slane %v1651, 2
      %v1654 = vshll.u32 %v1137, 16
      %v1656 = vrot.slane %v1654, 3
      %v1657 = vor.u32 %v1653, %v1656
      %v1658 = vsel %vm514, %v1581, %v1657
      %v1660 = vshrl.u32 %v1160, 16
      %v1662 = vrot.slane %v1660, 2
      %v1663 = vshll.u32 %v1160, 16
      %v1665 = vrot.slane %v1663, 3
      %v1666 = vor.u32 %v1662, %v1665
      %v1667 = vsel %vm514, %v1590, %v1666
      %v1669 = vshrl.u32 %v1175, 16
      %v1671 = vrot.slane %v1669, 2
      %v1672 = vshll.u32 %v1175, 16
      %v1674 = vrot.slane %v1672, 3
      %v1675 = vor.u32 %v1671, %v1674
      %v1676 = vsel %vm514, %v1599, %v1675
      %v1678 = vshrl.u32 %v1221, 16
      %v1680 = vrot.slane %v1678, 2
      %v1681 = vshll.u32 %v1221, 16
      %v1683 = vrot.slane %v1681, 3
      %v1684 = vor.u32 %v1680, %v1683
      %v1685 = vsel %vm514, %v1608, %v1684
      %v1687 = vshrl.u32 %v1241, 16
      %v1689 = vrot.slane %v1687, 2
      %v1690 = vshll.u32 %v1241, 16
      %v1692 = vrot.slane %v1690, 3
      %v1693 = vor.u32 %v1689, %v1692
      %v1694 = vsel %vm514, %v1617, %v1693
      %v1695 = vrot.slane %v1080, 2
      %v1696 = vrot.slane %v1076, 3
      %v1697 = vor.u32 %v1695, %v1696
      %v1698 = vsel %vm514, %v1621, %v1697
      %v1700 = vshrl.u32 %v1087, 16
      %v1702 = vrot.slane %v1700, 2
      %v1703 = vshll.u32 %v1087, 16
      %v1705 = vrot.slane %v1703, 3
      %v1706 = vor.u32 %v1702, %v1705
      %v1707 = vsel %vm514, %v1630, %v1706
      %v1709 = vshrl.u32 %v1107, 16
      %v1711 = vrot.slane %v1709, 2
      %v1712 = vshll.u32 %v1107, 16
      %v1714 = vrot.slane %v1712, 3
      %v1715 = vor.u32 %v1711, %v1714
      %v1716 = vsel %vm514, %v1639, %v1715
      %v1718 = vshrl.u32 %v1121, 16
      %v1720 = vrot.slane %v1718, 2
      %v1721 = vshll.u32 %v1121, 16
      %v1723 = vrot.slane %v1721, 3
      %v1724 = vor.u32 %v1720, %v1723
      %v1725 = vsel %vm514, %v1648, %v1724
      %v1727 = vshrl.u32 %v1146, 16
      %v1729 = vrot.slane %v1727, 2
      %v1730 = vshll.u32 %v1146, 16
      %v1732 = vrot.slane %v1730, 3
      %v1733 = vor.u32 %v1729, %v1732
      %v1734 = vsel %vm514, %v1657, %v1733
      %v1736 = vshrl.u32 %v1162, 16
      %v1738 = vrot.slane %v1736, 2
      %v1739 = vshll.u32 %v1162, 16
      %v1741 = vrot.slane %v1739, 3
      %v1742 = vor.u32 %v1738, %v1741
      %v1743 = vsel %vm514, %v1666, %v1742
      %v1745 = vshrl.u32 %v1177, 16
      %v1747 = vrot.slane %v1745, 2
      %v1748 = vshll.u32 %v1177, 16
      %v1750 = vrot.slane %v1748, 3
      %v1751 = vor.u32 %v1747, %v1750
      %v1752 = vsel %vm514, %v1675, %v1751
      %v1754 = vshrl.u32 %v1230, 16
      %v1756 = vrot.slane %v1754, 2
      %v1757 = vshll.u32 %v1230, 16
      %v1759 = vrot.slane %v1757, 3
      %v1760 = vor.u32 %v1756, %v1759
      %v1761 = vsel %vm514, %v1684, %v1760
      %v1763 = vshrl.u32 %v1243, 16
      %v1765 = vrot.slane %v1763, 2
      %v1766 = vshll.u32 %v1243, 16
      %v1768 = vrot.slane %v1766, 3
      %v1769 = vor.u32 %v1765, %v1768
      %v1770 = vsel %vm514, %v1693, %v1769
      %v1771 = vrot.slane %v1088, 2
      %v1772 = vrot.slane %v1084, 3
      %v1773 = vor.u32 %v1771, %v1772
      %v1774 = vsel %vm514, %v1697, %v1773
      %v1776 = vshrl.u32 %v1090, 16
      %v1778 = vrot.slane %v1776, 2
      %v1779 = vshll.u32 %v1090, 16
      %v1781 = vrot.slane %v1779, 3
      %v1782 = vor.u32 %v1778, %v1781
      %v1783 = vsel %vm514, %v1706, %v1782
      %v1785 = vshrl.u32 %v1106, 16
      %v1787 = vrot.slane %v1785, 2
      %v1788 = vshll.u32 %v1106, 16
      %v1790 = vrot.slane %v1788, 3
      %v1791 = vor.u32 %v1787, %v1790
      %v1792 = vsel %vm514, %v1715, %v1791
      %v1794 = vshrl.u32 %v1120, 16
      %v1796 = vrot.slane %v1794, 2
      %v1797 = vshll.u32 %v1120, 16
      %v1799 = vrot.slane %v1797, 3
      %v1800 = vor.u32 %v1796, %v1799
      %v1801 = vsel %vm514, %v1724, %v1800
      %v1803 = vshrl.u32 %v1145, 16
      %v1805 = vrot.slane %v1803, 2
      %v1806 = vshll.u32 %v1145, 16
      %v1808 = vrot.slane %v1806, 3
      %v1809 = vor.u32 %v1805, %v1808
      %v1810 = vsel %vm514, %v1733, %v1809
      %v1812 = vshrl.u32 %v1164, 16
      %v1814 = vrot.slane %v1812, 2
      %v1815 = vshll.u32 %v1164, 16
      %v1817 = vrot.slane %v1815, 3
      %v1818 = vor.u32 %v1814, %v1817
      %v1819 = vsel %vm514, %v1742, %v1818
      %v1821 = vshrl.u32 %v1176, 16
      %v1823 = vrot.slane %v1821, 2
      %v1824 = vshll.u32 %v1176, 16
      %v1826 = vrot.slane %v1824, 3
      %v1827 = vor.u32 %v1823, %v1826
      %v1828 = vsel %vm514, %v1751, %v1827
      %v1830 = vshrl.u32 %v1229, 16
      %v1832 = vrot.slane %v1830, 2
      %v1833 = vshll.u32 %v1229, 16
      %v1835 = vrot.slane %v1833, 3
      %v1836 = vor.u32 %v1832, %v1835
      %v1837 = vsel %vm514, %v1760, %v1836
      %v1839 = vshrl.u32 %v1242, 16
      %v1841 = vrot.slane %v1839, 2
      %v1842 = vshll.u32 %v1242, 16
      %v1844 = vrot.slane %v1842, 3
      %v1845 = vor.u32 %v1841, %v1844
      %v1846 = vsel %vm514, %v1769, %v1845
      %v2036 = vunpack.c.l.b16 %v1244
      %v2037 = vunpack.c.l.b16 %v1245
      %v2038 = vunpack.c.l.b16 %v1246
      %v2039 = vunpack.c.l.b16 %v1247
      %v2040 = vunpack.c.l.b16 %v1248
      %v2041 = vunpack.c.l.b16 %v1249
      %v2042 = vunpack.c.l.b16 %v1250
      %v2043 = vunpack.c.l.b16 %v1251
      %v2044 = vunpack.c.l.b16 %v1252
      %v2045 = vunpack.c.l.b16 %v1253
      %v2046 = vunpack.c.l.b16 %v1254
      %v2047 = vunpack.c.l.b16 %v1255
      %v2048 = vunpack.c.l.b16 %v1256
      %v2049 = vunpack.c.l.b16 %v1257
      %v2050 = vunpack.c.l.b16 %v1258
      %v2051 = vunpack.c.l.b16 %v1259
      %v2052 = vunpack.c.l.b16 %v1260
      %v2053 = vunpack.c.l.b16 %v1261
      %v2054 = vunpack.c.l.b16 %v1262
      %v2055 = vunpack.c.l.b16 %v1263
      %v2056 = vunpack.c.l.b16 %v1264
      %v2057 = vunpack.c.l.b16 %v1265
      %v2058 = vunpack.c.l.b16 %v1266
      %v2059 = vunpack.c.l.b16 %v1267
      %v2060 = vunpack.c.l.b16 %v1268
      %v2061 = vunpack.c.l.b16 %v1269
      %v2062 = vunpack.c.l.b16 %v1270
      %v2063 = vunpack.c.l.b16 %v1271
      %v2064 = vunpack.c.l.b16 %v1272
      %v2065 = vunpack.c.l.b16 %v1273
      %v2066 = vunpack.c.l.b16 %v1274
      %v2067 = vunpack.c.l.b16 %v1275
      %v2068 = vunpack.c.l.b16 %v1276
      %v2069 = vunpack.c.l.b16 %v1277
      %v2070 = vunpack.c.l.b16 %v1278
      %v2071 = vunpack.c.l.b16 %v1279
      %v2072 = vunpack.c.l.b16 %v1280
      %v2073 = vunpack.c.l.b16 %v1281
      %v2074 = vunpack.c.l.b16 %v1282
      %v2075 = vunpack.c.l.b16 %v1283
      %v2076 = vunpack.c.l.b16 %v1284
      %v2077 = vunpack.c.l.b16 %v1285
      %v2078 = vunpack.c.l.b16 %v1286
      %v2079 = vunpack.c.l.b16 %v1287
      %v2080 = vunpack.c.l.b16 %v1288
      %v2081 = vunpack.c.l.b16 %v1289
      %v2082 = vunpack.c.l.b16 %v1290
      %v2083 = vunpack.c.l.b16 %v1291
      %v2084 = vunpack.c.l.b16 %v1292
      %v2085 = vunpack.c.l.b16 %v1293
      %v2086 = vunpack.c.l.b16 %v1294
      %v2087 = vunpack.c.l.b16 %v1295
      %v2088 = vunpack.c.l.b16 %v1296
      %v2089 = vunpack.c.l.b16 %v1297
      %v2090 = vunpack.c.l.b16 %v1298
      %v2091 = vunpack.c.l.b16 %v1299
      %v2092 = vunpack.c.l.b16 %v1300
      %v2093 = vunpack.c.l.b16 %v1301
      %v2094 = vunpack.c.l.b16 %v1302
      %v2095 = vunpack.c.l.b16 %v1303
      %v2096 = vunpack.c.l.b16 %v1304
      %v2097 = vunpack.c.l.b16 %v1305
      %v2098 = vunpack.c.l.b16 %v1306
      %v2099 = vunpack.c.l.b16 %v1307
      %v2100 = vunpack.c.l.b16 %v1308
      %v2101 = vunpack.c.l.b16 %v1309
      %v2102 = vunpack.c.l.b16 %v1310
      %v2103 = vunpack.c.l.b16 %v1311
      %v2104 = vunpack.c.l.b16 %v1312
      %v2105 = vunpack.c.l.b16 %v1313
      %v2106 = vunpack.c.l.b16 %v1314
      %v2107 = vunpack.c.l.b16 %v1315
      %v2108 = vunpack.c.l.b16 %v1316
      %v2109 = vunpack.c.l.b16 %v1317
      %v2110 = vunpack.c.l.b16 %v1318
      %v2111 = vunpack.c.l.b16 %v1319
      %v2112 = vunpack.c.l.b16 %v1320
      %v2113 = vunpack.c.l.b16 %v1321
      %v2114 = vunpack.c.l.b16 %v1322
      %v2115 = vunpack.c.l.b16 %v1323
      %v2116 = vunpack.c.l.b16 %v1324
      %v2117 = vunpack.c.l.b16 %v1325
      %v2118 = vunpack.c.l.b16 %v1326
      %v2119 = vunpack.c.l.b16 %v1327
      %v2120 = vunpack.c.l.b16 %v1328
      %v2121 = vunpack.c.l.b16 %v1329
      %v2122 = vunpack.c.l.b16 %v1330
      %v2123 = vunpack.c.l.b16 %v1331
      %v2124 = vunpack.c.l.b16 %v1332
      %v2125 = vunpack.c.l.b16 %v1333
      %v2126 = vunpack.c.l.b16 %v1334
      %v2127 = vunpack.c.l.b16 %v1335
      %v2128 = vunpack.c.l.b16 %v1336
      %v2129 = vunpack.c.l.b16 %v1337
      %v2130 = vunpack.c.l.b16 %v1338
      %v2131 = vunpack.c.l.b16 %v1339
      %v2132 = vunpack.c.l.b16 %v1340
      %v2133 = vunpack.c.l.b16 %v1341
      %v2134 = vunpack.c.l.b16 %v1342
      %v2135 = vunpack.c.l.b16 %v1343
      %v2136 = vunpack.c.l.b16 %v1344
      %v2137 = vunpack.c.l.b16 %v1345
      %v2138 = vunpack.c.l.b16 %v1346
      %v2139 = vunpack.c.l.b16 %v1347
      %v2140 = vunpack.c.l.b16 %v1348
      %v2141 = vunpack.c.l.b16 %v1349
      %v2142 = vunpack.c.l.b16 %v1350
      %v2143 = vunpack.c.l.b16 %v1351
      %v2144 = vunpack.c.l.b16 %v1352
      %v2145 = vunpack.c.l.b16 %v1353
      %v2146 = vunpack.c.l.b16 %v1354
      %v2147 = vunpack.c.l.b16 %v1355
      %v2148 = vunpack.c.l.b16 %v1356
      %v2149 = vunpack.c.l.b16 %v1357
      %v2150 = vunpack.c.l.b16 %v1358
      %v2151 = vunpack.c.l.b16 %v1359
      %v2152 = vunpack.c.l.b16 %v1360
      %v2153 = vunpack.c.l.b16 %v1361
      %v2154 = vunpack.c.l.b16 %v1362
      %v2155 = vunpack.c.l.b16 %v1363
      %v2156 = vunpack.c.l.b16 %v1364
      %v2157 = vunpack.c.l.b16 %v1365
      %v2158 = vunpack.c.l.b16 %v1366
      %v2159 = vunpack.c.l.b16 %v1367
      %v2160 = vunpack.c.l.b16 %v1368
      %v2161 = vunpack.c.l.b16 %v1369
      %v2162 = vunpack.c.l.b16 %v1370
      %v2163 = vunpack.c.l.b16 %v1371
      %v2164 = vunpack.c.l.b16 %v1372
      %v2165 = vunpack.c.l.b16 %v1373
      %v2166 = vunpack.c.l.b16 %v1374
      %v2167 = vunpack.c.l.b16 %v1375
      %v2168 = vunpack.c.l.b16 %v1376
      %v2169 = vunpack.c.l.b16 %v1377
      %v2170 = vunpack.c.l.b16 %v1378
      %v2171 = vunpack.c.l.b16 %v1379
      %v2172 = vunpack.c.l.b16 %v1380
      %v2173 = vunpack.c.l.b16 %v1381
      %v2174 = vunpack.c.l.b16 %v1382
      %v2175 = vunpack.c.l.b16 %v1383
      %v2176 = vunpack.c.l.b16 %v1384
      %v2177 = vunpack.c.l.b16 %v1385
      %v2178 = vunpack.c.l.b16 %v1386
      %v2179 = vunpack.c.l.b16 %v1387
      %v2180 = vpack.c.b16 %v2037, %v2036
      %v2181 = vpack.c.b16 %v2039, %v2038
      %v2182 = vpack.c.b16 %v2041, %v2040
      %v2183 = vpack.c.b16 %v2043, %v2042
      %v2184 = vpack.c.b16 %v2045, %v2044
      %v2185 = vpack.c.b16 %v2047, %v2046
      %v2186 = vpack.c.b16 %v2049, %v2048
      %v2187 = vpack.c.b16 %v2051, %v2050
      %v2188 = vpack.c.b16 %v2053, %v2052
      %v2189 = vpack.c.b16 %v2055, %v2054
      %v2190 = vpack.c.b16 %v2057, %v2056
      %v2191 = vpack.c.b16 %v2059, %v2058
      %v2192 = vpack.c.b16 %v2061, %v2060
      %v2193 = vpack.c.b16 %v2063, %v2062
      %v2194 = vpack.c.b16 %v2065, %v2064
      %v2195 = vpack.c.b16 %v2067, %v2066
      %v2196 = vpack.c.b16 %v2069, %v2068
      %v2197 = vpack.c.b16 %v2071, %v2070
      %v2198 = vpack.c.b16 %v2073, %v2072
      %v2199 = vpack.c.b16 %v2075, %v2074
      %v2200 = vpack.c.b16 %v2077, %v2076
      %v2201 = vpack.c.b16 %v2079, %v2078
      %v2202 = vpack.c.b16 %v2081, %v2080
      %v2203 = vpack.c.b16 %v2083, %v2082
      %v2204 = vpack.c.b16 %v2085, %v2084
      %v2205 = vpack.c.b16 %v2087, %v2086
      %v2206 = vpack.c.b16 %v2089, %v2088
      %v2207 = vpack.c.b16 %v2091, %v2090
      %v2208 = vpack.c.b16 %v2093, %v2092
      %v2209 = vpack.c.b16 %v2095, %v2094
      %v2210 = vpack.c.b16 %v2097, %v2096
      %v2211 = vpack.c.b16 %v2099, %v2098
      %v2212 = vpack.c.b16 %v2101, %v2100
      %v2213 = vpack.c.b16 %v2103, %v2102
      %v2214 = vpack.c.b16 %v2105, %v2104
      %v2215 = vpack.c.b16 %v2107, %v2106
      %v2216 = vpack.c.b16 %v2109, %v2108
      %v2217 = vpack.c.b16 %v2111, %v2110
      %v2218 = vpack.c.b16 %v2113, %v2112
      %v2219 = vpack.c.b16 %v2115, %v2114
      %v2220 = vpack.c.b16 %v2117, %v2116
      %v2221 = vpack.c.b16 %v2119, %v2118
      %v2222 = vpack.c.b16 %v2121, %v2120
      %v2223 = vpack.c.b16 %v2123, %v2122
      %v2224 = vpack.c.b16 %v2125, %v2124
      %v2225 = vpack.c.b16 %v2127, %v2126
      %v2226 = vpack.c.b16 %v2129, %v2128
      %v2227 = vpack.c.b16 %v2131, %v2130
      %v2228 = vpack.c.b16 %v2133, %v2132
      %v2229 = vpack.c.b16 %v2135, %v2134
      %v2230 = vpack.c.b16 %v2137, %v2136
      %v2231 = vpack.c.b16 %v2139, %v2138
      %v2232 = vpack.c.b16 %v2141, %v2140
      %v2233 = vpack.c.b16 %v2143, %v2142
      %v2234 = vpack.c.b16 %v2145, %v2144
      %v2235 = vpack.c.b16 %v2147, %v2146
      %v2236 = vpack.c.b16 %v2149, %v2148
      %v2237 = vpack.c.b16 %v2151, %v2150
      %v2238 = vpack.c.b16 %v2153, %v2152
      %v2239 = vpack.c.b16 %v2155, %v2154
      %v2240 = vpack.c.b16 %v2157, %v2156
      %v2241 = vpack.c.b16 %v2159, %v2158
      %v2242 = vpack.c.b16 %v2161, %v2160
      %v2243 = vpack.c.b16 %v2163, %v2162
      %v2244 = vpack.c.b16 %v2165, %v2164
      %v2245 = vpack.c.b16 %v2167, %v2166
      %v2246 = vpack.c.b16 %v2169, %v2168
      %v2247 = vpack.c.b16 %v2171, %v2170
      %v2248 = vpack.c.b16 %v2173, %v2172
      %v2249 = vpack.c.b16 %v2175, %v2174
      %v2250 = vpack.c.b16 %v2177, %v2176
      %v2251 = vpack.c.b16 %v2179, %v2178
      %2324 = vmatprep.subr.bf16.mxu0 0
      %2325 = vmatpush1.bf16.msra.mxu0 %v2180
      %2326 = vmatprep.subr.bf16.mxu0 0
      %2327 = vmatpush1.bf16.msra.mxu0 %v2181
      %2328 = vmatprep.subr.bf16.mxu0 0
      %2329 = vmatpush1.bf16.msra.mxu0 %v2182
      %2330 = vmatprep.subr.bf16.mxu0 0
      %2331 = vmatpush1.bf16.msra.mxu0 %v2183
      %2332 = vmatprep.subr.bf16.mxu0 0
      %2333 = vmatpush1.bf16.msra.mxu0 %v2184
      %2334 = vmatprep.subr.bf16.mxu0 0
      %2335 = vmatpush1.bf16.msra.mxu0 %v2185
      %2336 = vmatprep.subr.bf16.mxu0 0
      %2337 = vmatpush1.bf16.msra.mxu0 %v2186
      %2338 = vmatprep.subr.bf16.mxu0 0
      %2339 = vmatpush1.bf16.msra.mxu0 %v2187
      %2340 = vmatprep.subr.bf16.mxu0 0
      %2341 = vmatpush1.bf16.msra.mxu0 %v2188
      %2342 = vmatprep.subr.bf16.mxu0 0
      %2343 = vmatpush1.bf16.msra.mxu0 %v2189
      %2344 = vmatprep.subr.bf16.mxu0 0
      %2345 = vmatpush1.bf16.msra.mxu0 %v2190
      %2346 = vmatprep.subr.bf16.mxu0 0
      %2347 = vmatpush1.bf16.msra.mxu0 %v2191
      %2348 = vmatprep.subr.bf16.mxu0 0
      %2349 = vmatpush1.bf16.msra.mxu0 %v2192
      %2350 = vmatprep.subr.bf16.mxu0 0
      %2351 = vmatpush1.bf16.msra.mxu0 %v2193
      %2352 = vmatprep.subr.bf16.mxu0 0
      %2353 = vmatpush1.bf16.msra.mxu0 %v2194
      %2354 = vmatprep.subr.bf16.mxu0 0
      %2355 = vmatpush1.bf16.msra.mxu0 %v2195
      %2356 = vmatprep.mubr.bf16.mxu0 %v1423
      %2357 = vmatmul.mubr.bf16.gmra.mrb[0].mxu0 %v1406
      %v2358 = vpop.f32.mrb[0].mxu0
      %v2359 = vadd.f32 %v1393, %v2358
      %v2360 = vpop.f32.mrb[0].mxu0
      %v2361 = vpop.f32.mrb[0].mxu0
      %v2362 = vadd.f32 %v1393, %v2361
      %v2363 = vpop.f32.mrb[0].mxu0
      %2364 = vmatprep.mubr.bf16.mxu0 %v1555
      %2365 = vmatmul.mubr.bf16.gmra.mrb[0].mxu0 %v1546
      %v2366 = vpop.f32.mrb[0].mxu0
      %v2367 = vadd.f32 %v1393, %v2366
      %v2368 = vpop.f32.mrb[0].mxu0
      %v2369 = vpop.f32.mrb[0].mxu0
      %v2370 = vadd.f32 %v1393, %v2369
      %v2371 = vpop.f32.mrb[0].mxu0
      %2372 = vmatprep.mubr.bf16.mxu0 %v1631
      %2373 = vmatmul.mubr.bf16.gmra.mrb[0].mxu0 %v1622
      %v2374 = vpop.f32.mrb[0].mxu0
      %v2375 = vadd.f32 %v1393, %v2374
      %v2376 = vpop.f32.mrb[0].mxu0
      %v2377 = vpop.f32.mrb[0].mxu0
      %v2378 = vadd.f32 %v1393, %v2377
      %v2379 = vpop.f32.mrb[0].mxu0
      %2380 = vmatprep.mubr.bf16.mxu0 %v1707
      %2381 = vmatmul.mubr.bf16.gmra.mrb[0].mxu0 %v1698
      %v2382 = vpop.f32.mrb[0].mxu0
      %v2383 = vadd.f32 %v1393, %v2382
      %v2384 = vpop.f32.mrb[0].mxu0
      %v2385 = vpop.f32.mrb[0].mxu0
      %v2386 = vadd.f32 %v1393, %v2385
      %v2387 = vpop.f32.mrb[0].mxu0
      %2388 = vmatprep.mubr.bf16.mxu0 %v1783
      %2389 = vmatmul.mubr.bf16.gmra.mrb[0].mxu0 %v1774
      %v2390 = vpop.f32.mrb[0].mxu0
      %v2391 = vadd.f32 %v1393, %v2390
      %v2392 = vpop.f32.mrb[0].mxu0
      %v2393 = vpop.f32.mrb[0].mxu0
      %v2394 = vadd.f32 %v1393, %v2393
      %v2395 = vpop.f32.mrb[0].mxu0
      %2396 = vdwg.mxu0
      %2397 = vmatprep.subr.bf16.mxu0 0
      %2398 = vmatpush1.bf16.msra.mxu0 %v2196
      %2399 = vmatprep.subr.bf16.mxu0 0
      %2400 = vmatpush1.bf16.msra.mxu0 %v2197
      %2401 = vmatprep.subr.bf16.mxu0 0
      %2402 = vmatpush1.bf16.msra.mxu0 %v2198
      %2403 = vmatprep.subr.bf16.mxu0 0
      %2404 = vmatpush1.bf16.msra.mxu0 %v2199
      %2405 = vmatprep.subr.bf16.mxu0 0
      %2406 = vmatpush1.bf16.msra.mxu0 %v2200
      %2407 = vmatprep.subr.bf16.mxu0 0
      %2408 = vmatpush1.bf16.msra.mxu0 %v2201
      %2409 = vmatprep.subr.bf16.mxu0 0
      %2410 = vmatpush1.bf16.msra.mxu0 %v2202
      %2411 = vmatprep.subr.bf16.mxu0 0
      %2412 = vmatpush1.bf16.msra.mxu0 %v2203
      %2413 = vmatprep.subr.bf16.mxu0 0
      %2414 = vmatpush1.bf16.msra.mxu0 %v2204
      %2415 = vmatprep.subr.bf16.mxu0 0
      %2416 = vmatpush1.bf16.msra.mxu0 %v2205
      %2417 = vmatprep.subr.bf16.mxu0 0
      %2418 = vmatpush1.bf16.msra.mxu0 %v2206
      %2419 = vmatprep.subr.bf16.mxu0 0
      %2420 = vmatpush1.bf16.msra.mxu0 %v2207
      %2421 = vmatprep.subr.bf16.mxu0 0
      %2422 = vmatpush1.bf16.msra.mxu0 %v2208
      %2423 = vmatprep.subr.bf16.mxu0 0
      %2424 = vmatpush1.bf16.msra.mxu0 %v2209
      %2425 = vmatprep.subr.bf16.mxu0 0
      %2426 = vmatpush1.bf16.msra.mxu0 %v2210
      %2427 = vmatprep.subr.bf16.mxu0 0
      %2428 = vmatpush1.bf16.msra.mxu0 %v2211
      %2429 = vmatprep.mubr.bf16.mxu0 %v1457
      %2430 = vmatmul.mubr.bf16.gmra.mrb[0].mxu0 %v1440
      %v2431 = vpop.f32.mrb[0].mxu0
      %v2432 = vadd.f32 %v2359, %v2431
      %v2433 = vpop.f32.mrb[0].mxu0
      %v2434 = vpop.f32.mrb[0].mxu0
      %v2435 = vadd.f32 %v2362, %v2434
      %v2436 = vpop.f32.mrb[0].mxu0
      %2437 = vmatprep.mubr.bf16.mxu0 %v1573
      %2438 = vmatmul.mubr.bf16.gmra.mrb[0].mxu0 %v1564
      %v2439 = vpop.f32.mrb[0].mxu0
      %v2440 = vadd.f32 %v2367, %v2439
      %v2441 = vpop.f32.mrb[0].mxu0
      %v2442 = vpop.f32.mrb[0].mxu0
      %v2443 = vadd.f32 %v2370, %v2442
      %v2444 = vpop.f32.mrb[0].mxu0
      %2445 = vmatprep.mubr.bf16.mxu0 %v1649
      %2446 = vmatmul.mubr.bf16.gmra.mrb[0].mxu0 %v1640
      %v2447 = vpop.f32.mrb[0].mxu0
      %v2448 = vadd.f32 %v2375, %v2447
      %v2449 = vpop.f32.mrb[0].mxu0
      %v2450 = vpop.f32.mrb[0].mxu0
      %v2451 = vadd.f32 %v2378, %v2450
      %v2452 = vpop.f32.mrb[0].mxu0
      %2453 = vmatprep.mubr.bf16.mxu0 %v1725
      %2454 = vmatmul.mubr.bf16.gmra.mrb[0].mxu0 %v1716
      %v2455 = vpop.f32.mrb[0].mxu0
      %v2456 = vadd.f32 %v2383, %v2455
      %v2457 = vpop.f32.mrb[0].mxu0
      %v2458 = vpop.f32.mrb[0].mxu0
      %v2459 = vadd.f32 %v2386, %v2458
      %v2460 = vpop.f32.mrb[0].mxu0
      %2461 = vmatprep.mubr.bf16.mxu0 %v1801
      %2462 = vmatmul.mubr.bf16.gmra.mrb[0].mxu0 %v1792
      %v2463 = vpop.f32.mrb[0].mxu0
      %v2464 = vadd.f32 %v2391, %v2463
      %v2465 = vpop.f32.mrb[0].mxu0
      %v2466 = vpop.f32.mrb[0].mxu0
      %v2467 = vadd.f32 %v2394, %v2466
      %v2468 = vpop.f32.mrb[0].mxu0
      %2469 = vdwg.mxu0
      %2470 = vmatprep.subr.bf16.mxu0 0
      %2471 = vmatpush1.bf16.msra.mxu0 %v2212
      %2472 = vmatprep.subr.bf16.mxu0 0
      %2473 = vmatpush1.bf16.msra.mxu0 %v2213
      %2474 = vmatprep.subr.bf16.mxu0 0
      %2475 = vmatpush1.bf16.msra.mxu0 %v2214
      %2476 = vmatprep.subr.bf16.mxu0 0
      %2477 = vmatpush1.bf16.msra.mxu0 %v2215
      %2478 = vmatprep.subr.bf16.mxu0 0
      %2479 = vmatpush1.bf16.msra.mxu0 %v2216
      %2480 = vmatprep.subr.bf16.mxu0 0
      %2481 = vmatpush1.bf16.msra.mxu0 %v2217
      %2482 = vmatprep.subr.bf16.mxu0 0
      %2483 = vmatpush1.bf16.msra.mxu0 %v2218
      %2484 = vmatprep.subr.bf16.mxu0 0
      %2485 = vmatpush1.bf16.msra.mxu0 %v2219
      %2486 = vmatprep.subr.bf16.mxu0 0
      %2487 = vmatpush1.bf16.msra.mxu0 %v2220
      %2488 = vmatprep.subr.bf16.mxu0 0
      %2489 = vmatpush1.bf16.msra.mxu0 %v2221
      %2490 = vmatprep.subr.bf16.mxu0 0
      %2491 = vmatpush1.bf16.msra.mxu0 %v2222
      %2492 = vmatprep.subr.bf16.mxu0 0
      %2493 = vmatpush1.bf16.msra.mxu0 %v2223
      %2494 = vmatprep.subr.bf16.mxu0 0
      %2495 = vmatpush1.bf16.msra.mxu0 %v2224
      %2496 = vmatprep.subr.bf16.mxu0 0
      %2497 = vmatpush1.bf16.msra.mxu0 %v2225
      %2498 = vmatprep.subr.bf16.mxu0 0
      %2499 = vmatpush1.bf16.msra.mxu0 %v2226
      %2500 = vmatprep.subr.bf16.mxu0 0
      %2501 = vmatpush1.bf16.msra.mxu0 %v2227
      %2502 = vmatprep.mubr.bf16.mxu0 %v1491
      %2503 = vmatmul.mubr.bf16.gmra.mrb[0].mxu0 %v1474
      %v2504 = vpop.f32.mrb[0].mxu0
      %v2505 = vadd.f32 %v2432, %v2504
      %v2506 = vpop.f32.mrb[0].mxu0
      %v2507 = vpop.f32.mrb[0].mxu0
      %v2508 = vadd.f32 %v2435, %v2507
      %v2509 = vpop.f32.mrb[0].mxu0
      %2510 = vmatprep.mubr.bf16.mxu0 %v1591
      %2511 = vmatmul.mubr.bf16.gmra.mrb[0].mxu0 %v1582
      %v2512 = vpop.f32.mrb[0].mxu0
      %v2513 = vadd.f32 %v2440, %v2512
      %v2514 = vpop.f32.mrb[0].mxu0
      %v2515 = vpop.f32.mrb[0].mxu0
      %v2516 = vadd.f32 %v2443, %v2515
      %v2517 = vpop.f32.mrb[0].mxu0
      %2518 = vmatprep.mubr.bf16.mxu0 %v1667
      %2519 = vmatmul.mubr.bf16.gmra.mrb[0].mxu0 %v1658
      %v2520 = vpop.f32.mrb[0].mxu0
      %v2521 = vadd.f32 %v2448, %v2520
      %v2522 = vpop.f32.mrb[0].mxu0
      %v2523 = vpop.f32.mrb[0].mxu0
      %v2524 = vadd.f32 %v2451, %v2523
      %v2525 = vpop.f32.mrb[0].mxu0
      %2526 = vmatprep.mubr.bf16.mxu0 %v1743
      %2527 = vmatmul.mubr.bf16.gmra.mrb[0].mxu0 %v1734
      %v2528 = vpop.f32.mrb[0].mxu0
      %v2529 = vadd.f32 %v2456, %v2528
      %v2530 = vpop.f32.mrb[0].mxu0
      %v2531 = vpop.f32.mrb[0].mxu0
      %v2532 = vadd.f32 %v2459, %v2531
      %v2533 = vpop.f32.mrb[0].mxu0
      %2534 = vmatprep.mubr.bf16.mxu0 %v1819
      %2535 = vmatmul.mubr.bf16.gmra.mrb[0].mxu0 %v1810
      %v2536 = vpop.f32.mrb[0].mxu0
      %v2537 = vadd.f32 %v2464, %v2536
      %v2538 = vpop.f32.mrb[0].mxu0
      %v2539 = vpop.f32.mrb[0].mxu0
      %v2540 = vadd.f32 %v2467, %v2539
      %v2541 = vpop.f32.mrb[0].mxu0
      %2542 = vdwg.mxu0
      %2543 = vmatprep.subr.bf16.mxu0 0
      %2544 = vmatpush1.bf16.msra.mxu0 %v2228
      %2545 = vmatprep.subr.bf16.mxu0 0
      %2546 = vmatpush1.bf16.msra.mxu0 %v2229
      %2547 = vmatprep.subr.bf16.mxu0 0
      %2548 = vmatpush1.bf16.msra.mxu0 %v2230
      %2549 = vmatprep.subr.bf16.mxu0 0
      %2550 = vmatpush1.bf16.msra.mxu0 %v2231
      %2551 = vmatprep.subr.bf16.mxu0 0
      %2552 = vmatpush1.bf16.msra.mxu0 %v2232
      %2553 = vmatprep.subr.bf16.mxu0 0
      %2554 = vmatpush1.bf16.msra.mxu0 %v2233
      %2555 = vmatprep.subr.bf16.mxu0 0
      %2556 = vmatpush1.bf16.msra.mxu0 %v2234
      %2557 = vmatprep.subr.bf16.mxu0 0
      %2558 = vmatpush1.bf16.msra.mxu0 %v2235
      %2559 = vmatprep.subr.bf16.mxu0 0
      %2560 = vmatpush1.bf16.msra.mxu0 %v2236
      %2561 = vmatprep.subr.bf16.mxu0 0
      %2562 = vmatpush1.bf16.msra.mxu0 %v2237
      %2563 = vmatprep.subr.bf16.mxu0 0
      %2564 = vmatpush1.bf16.msra.mxu0 %v2238
      %2565 = vmatprep.subr.bf16.mxu0 0
      %2566 = vmatpush1.bf16.msra.mxu0 %v2239
      %2567 = vmatprep.subr.bf16.mxu0 0
      %2568 = vmatpush1.bf16.msra.mxu0 %v2240
      %2569 = vmatprep.subr.bf16.mxu0 0
      %2570 = vmatpush1.bf16.msra.mxu0 %v2241
      %2571 = vmatprep.subr.bf16.mxu0 0
      %2572 = vmatpush1.bf16.msra.mxu0 %v2242
      %2573 = vmatprep.subr.bf16.mxu0 0
      %2574 = vmatpush1.bf16.msra.mxu0 %v2243
      %2575 = vmatprep.mubr.bf16.mxu0 %v1525
      %2576 = vmatmul.mubr.bf16.gmra.mrb[0].mxu0 %v1508
      %v2577 = vpop.f32.mrb[0].mxu0
      %v2578 = vadd.f32 %v2505, %v2577
      %v2579 = vpop.f32.mrb[0].mxu0
      %v2580 = vpop.f32.mrb[0].mxu0
      %v2581 = vadd.f32 %v2508, %v2580
      %v2582 = vpop.f32.mrb[0].mxu0
      %2583 = vmatprep.mubr.bf16.mxu0 %v1609
      %2584 = vmatmul.mubr.bf16.gmra.mrb[0].mxu0 %v1600
      %v2585 = vpop.f32.mrb[0].mxu0
      %v2586 = vadd.f32 %v2513, %v2585
      %v2587 = vpop.f32.mrb[0].mxu0
      %v2588 = vpop.f32.mrb[0].mxu0
      %v2589 = vadd.f32 %v2516, %v2588
      %v2590 = vpop.f32.mrb[0].mxu0
      %2591 = vmatprep.mubr.bf16.mxu0 %v1685
      %2592 = vmatmul.mubr.bf16.gmra.mrb[0].mxu0 %v1676
      %v2593 = vpop.f32.mrb[0].mxu0
      %v2594 = vadd.f32 %v2521, %v2593
      %v2595 = vpop.f32.mrb[0].mxu0
      %v2596 = vpop.f32.mrb[0].mxu0
      %v2597 = vadd.f32 %v2524, %v2596
      %v2598 = vpop.f32.mrb[0].mxu0
      %2599 = vmatprep.mubr.bf16.mxu0 %v1761
      %2600 = vmatmul.mubr.bf16.gmra.mrb[0].mxu0 %v1752
      %v2601 = vpop.f32.mrb[0].mxu0
      %v2602 = vadd.f32 %v2529, %v2601
      %v2603 = vpop.f32.mrb[0].mxu0
      %v2604 = vpop.f32.mrb[0].mxu0
      %v2605 = vadd.f32 %v2532, %v2604
      %v2606 = vpop.f32.mrb[0].mxu0
      %2607 = vmatprep.mubr.bf16.mxu0 %v1837
      %2608 = vmatmul.mubr.bf16.gmra.mrb[0].mxu0 %v1828
      %v2609 = vpop.f32.mrb[0].mxu0
      %v2610 = vadd.f32 %v2537, %v2609
      %v2611 = vpop.f32.mrb[0].mxu0
      %v2612 = vpop.f32.mrb[0].mxu0
      %v2613 = vadd.f32 %v2540, %v2612
      %v2614 = vpop.f32.mrb[0].mxu0
      %2615 = vdwg.mxu0
      %2616 = vmatprep.subr.bf16.mxu0 0
      %2617 = vmatpush1.bf16.msra.mxu0 %v2244
      %2618 = vmatprep.subr.bf16.mxu0 0
      %2619 = vmatpush1.bf16.msra.mxu0 %v2245
      %2620 = vmatprep.subr.bf16.mxu0 0
      %2621 = vmatpush1.bf16.msra.mxu0 %v2246
      %2622 = vmatprep.subr.bf16.mxu0 0
      %2623 = vmatpush1.bf16.msra.mxu0 %v2247
      %2624 = vmatprep.subr.bf16.mxu0 0
      %2625 = vmatpush1.bf16.msra.mxu0 %v2248
      %2626 = vmatprep.subr.bf16.mxu0 0
      %2627 = vmatpush1.bf16.msra.mxu0 %v2249
      %2628 = vmatprep.subr.bf16.mxu0 0
      %2629 = vmatpush1.bf16.msra.mxu0 %v2250
      %2630 = vmatprep.subr.bf16.mxu0 0
      %2631 = vmatpush1.bf16.msra.mxu0 %v2251
      %2632 = vmatprep.subr.bf16.mxu0 0
      %2633 = vmatpush1.bf16.msra.mxu0 0
      %2634 = vmatprep.subr.bf16.mxu0 0
      %2635 = vmatpush1.bf16.msra.mxu0 0
      %2636 = vmatprep.subr.bf16.mxu0 0
      %2637 = vmatpush1.bf16.msra.mxu0 0
      %2638 = vmatprep.subr.bf16.mxu0 0
      %2639 = vmatpush1.bf16.msra.mxu0 0
      %2640 = vmatprep.subr.bf16.mxu0 0
      %2641 = vmatpush1.bf16.msra.mxu0 0
      %2642 = vmatprep.subr.bf16.mxu0 0
      %2643 = vmatpush1.bf16.msra.mxu0 0
      %2644 = vmatprep.subr.bf16.mxu0 0
      %2645 = vmatpush1.bf16.msra.mxu0 0
      %2646 = vmatprep.subr.bf16.mxu0 0
      %2647 = vmatpush1.bf16.msra.mxu0 0
      %2648 = vmatprep.mubr.bf16.mxu0 0
      %2649 = vmatmul.mubr.bf16.gmra.mrb[0].mxu0 %v1542
      %v2650 = vpop.f32.mrb[0].mxu0
      %v2651 = vadd.f32 %v2578, %v2650
      %v2652 = vpop.f32.mrb[0].mxu0
      %v2653 = vpop.f32.mrb[0].mxu0
      %v2654 = vadd.f32 %v2581, %v2653
      %v2655 = vpop.f32.mrb[0].mxu0
      %2656 = vmatprep.mubr.bf16.mxu0 0
      %2657 = vmatmul.mubr.bf16.gmra.mrb[0].mxu0 %v1618
      %v2658 = vpop.f32.mrb[0].mxu0
      %v2659 = vadd.f32 %v2586, %v2658
      %v2660 = vpop.f32.mrb[0].mxu0
      %v2661 = vpop.f32.mrb[0].mxu0
      %v2662 = vadd.f32 %v2589, %v2661
      %v2663 = vpop.f32.mrb[0].mxu0
      %2664 = vmatprep.mubr.bf16.mxu0 0
      %2665 = vmatmul.mubr.bf16.gmra.mrb[0].mxu0 %v1694
      %v2666 = vpop.f32.mrb[0].mxu0
      %v2667 = vadd.f32 %v2594, %v2666
      %v2668 = vpop.f32.mrb[0].mxu0
      %v2669 = vpop.f32.mrb[0].mxu0
      %v2670 = vadd.f32 %v2597, %v2669
      %v2671 = vpop.f32.mrb[0].mxu0
      %2672 = vmatprep.mubr.bf16.mxu0 0
      %2673 = vmatmul.mubr.bf16.gmra.mrb[0].mxu0 %v1770
      %v2674 = vpop.f32.mrb[0].mxu0
      %v2675 = vadd.f32 %v2602, %v2674
      %v2676 = vpop.f32.mrb[0].mxu0
      %v2677 = vpop.f32.mrb[0].mxu0
      %v2678 = vadd.f32 %v2605, %v2677
      %v2679 = vpop.f32.mrb[0].mxu0
      %2680 = vmatprep.mubr.bf16.mxu0 0
      %2681 = vmatmul.mubr.bf16.gmra.mrb[0].mxu0 %v1846
      %v2682 = vpop.f32.mrb[0].mxu0
      %v2683 = vadd.f32 %v2610, %v2682
      %v2684 = vpop.f32.mrb[0].mxu0
      %v2685 = vpop.f32.mrb[0].mxu0
      %v2686 = vadd.f32 %v2613, %v2685
      %v2687 = vpop.f32.mrb[0].mxu0
      %2688 = vdwg.mxu0
      %v2689 = vmax.f32 %v2651, 0.0
      %v2690 = vmax.f32 %v2654, 0.0
      %v2691 = vmax.f32 %v2659, 0.0
      %v2692 = vmax.f32 %v2662, 0.0
      %v2693 = vmax.f32 %v2667, 0.0
      %v2694 = vmax.f32 %v2670, 0.0
      %v2695 = vmax.f32 %v2675, 0.0
      %v2696 = vmax.f32 %v2678, 0.0
      %v2697 = vmax.f32 %v2683, 0.0
      %v2698 = vmax.f32 %v2686, 0.0
      %2699 = vst.msk [vmem:[%s224] sm:$0xff] %vm599, %v2689
      %2700 = vst.msk [vmem:[%s224 + $0x8] sm:$0xff] %vm599, %v2690
      %2701 = vst.msk [vmem:[%s224 + $0x10] sm:$0xff] %vm599, %v2691
      %2702 = vst.msk [vmem:[%s224 + $0x18] sm:$0xff] %vm599, %v2692
      %2703 = vst.msk [vmem:[%s224 + $0x20] sm:$0xff] %vm599, %v2693
      %2704 = vst.msk [vmem:[%s224 + $0x28] sm:$0xff] %vm599, %v2694
      %2705 = vst.msk [vmem:[%s224 + $0x30] sm:$0xff] %vm599, %v2695
      %2706 = vst.msk [vmem:[%s224 + $0x38] sm:$0xff] %vm599, %v2696
      %2707 = vst.msk [vmem:[%s224 + $0x40] sm:$0xff] %vm599, %v2697
      %2708 = vst.msk [vmem:[%s224 + $0x48] sm:$0xff] %vm599, %v2698
      %p2709 = scmp.lt.s32.totalorder %s16, 1
      %s2710 = scalar_select %p2709, %s16, 1
      %s2711 = smul.addr %s2710, 10
      %s2712 = smul.addr %s2711, 8
      %s2713 = scalar_lea.vmem %s5, %s2712
      // Predicated region
      $region41: #{down_forward.1} parent=39 // pred_check
        %p2714 = pneg %p144
      $region42: #{down_forward.1} parent=39 // pred_check_branch
        %2716 = sbr.rel (%p2714) target = $region44
      $region43: #{down_forward.1} parent=39 // pred_region
        _
      $region44: #{down_forward.1} parent=39 // pred_fallthru
        _
    $region40: #{down_forward.1} parent=5 // pred_fallthru
      _
    %p2717 = scmp.le.s32.totalorder 2, %s11
    // Predicated region
    $region45: #{down_forward.1} parent=5 // pred_check
      %p2718 = pneg %p2717
    $region46: #{down_forward.1} parent=5 // pred_check_branch
      %2720 = sbr.rel (%p2718) target = $region48
    $region47: #{down_forward.1} parent=5 // pred_region
      %s2721 = ssub.s32 %s11, 2
      // Predicated region
      $region49: #{down_forward.1} parent=47 // pred_check
        %p2722 = pneg %p150
      $region50: #{down_forward.1} parent=47 // pred_check_branch
        %2724 = sbr.rel (%p2722) target = $region52
      $region51: #{down_forward.1} parent=47 // pred_region
        %p2725 = scmp.lt.s32.totalorder %s17, 1
        %s2726 = scalar_select %p2725, %s17, 1
        %s2727 = smul.addr %s2726, 10
        %s2728 = smul.addr %s2727, 8
        %s2729 = scalar_lea.vmem %s5, %s2728
      $region52: #{down_forward.1} parent=47 // pred_fallthru
        _
    $region48: #{down_forward.1} parent=5 // pred_fallthru
      _
  $region6: #{down_forward.1} parent=0 // loop_footer
    %s15 = sadd.s32 1, %s11
  $region7: #{down_forward.1} parent=0 // loop_footer_branch
    %10 = sbr.rel target = $region3
  $region8: #{down_forward.1} parent=0 // loop_exit
    _

</llo_original>
